<compile_context>
chip_gen: v5e
topology: v5e:2x2
jax: 0.10.0
libtpu: 0.0.40
codegen_flags: <defaults>
</compile_context>

<pallas_src>
import functools

import jax
import jax.numpy as jnp
from jax.experimental import pallas as pl
from jax.experimental.pallas import tpu as pltpu


# -----------------------------------------------------------------------------
# Kernel
# -----------------------------------------------------------------------------
def _elan_kernel(x_ref, wtd_ref, btd_ref,
                 w1_ref, b1_ref, w2_ref, b2_ref,
                 w3_ref, b3_ref, w4_ref, b4_ref,
                 wf_ref, bf_ref, m_ref,
                 o_ref, pad_ref, stack_ref, *, H, W, half):
    """One batch element per grid step.

    x_ref    : (1, Cin, S)         input feature map, flat spatial (S = H*W)
    wtd_ref  : (2*half, Cin)       both 1x1 branches stacked (folded conv+BN)
    w1..w4   : (half, 9*half)      3x3 convs, taps laid out along K
    wf_ref   : (Cout_f, 4*half)    final 1x1 over the concat
    b*_ref   : (Cout, 1)           folded biases
    m_ref    : (2, S)              column-validity masks for dx = -1 / +1 taps
    o_ref    : (1, Cout_f, S)
    pad_ref  : VMEM (half, S + 2*(W+1))  zero-haloed flat feature map
    stack_ref: VMEM (9*half, S)          shifted-tap / concat staging buffer
    """
    S = H * W
    P = W + 1
    f32 = jnp.float32

    def silu(v):
        return v * (1.0 / (1.0 + jnp.exp(-v)))

    # Zero the padded scratch once per grid step; conv steps only rewrite the
    # centre, so the halo stays zero (this implements vertical zero padding).
    pad_ref[...] = jnp.zeros((half, S + 2 * P), f32)

    x = x_ref[0]                                   # (Cin, S)
    mask_l = m_ref[0:1, :]                         # valid source for dx = -1
    mask_r = m_ref[1:2, :]                         # valid source for dx = +1

    # --- both 1x1 CBS branches in ONE matmul ---------------------------------
    td = silu(jnp.dot(wtd_ref[...], x, preferred_element_type=f32)
              + btd_ref[...])                      # (2*half, S)
    c1 = td[:half]                                 # partialc_t
    c2 = td[half:]                                 # partialc_d

    # --- 3x3 / stride 1 / pad 1 CBS: gather 9 taps, ONE matmul ---------------
    def cbs3x3(v, w_ref_, b_ref_):
        pad_ref[:, P:P + S] = v                    # write centre, halo stays 0
        for dy in (-1, 0, 1):
            for dx in (-1, 0, 1):
                k = (dy + 1) * 3 + (dx + 1)        # static tap index
                off = P + dy * W + dx              # static slice start
                s = pad_ref[:, off:off + S]        # (half, S) shifted view
                if dx == -1:
                    s = s * mask_l                 # kill wrapped columns
                elif dx == 1:
                    s = s * mask_r
                stack_ref[k * half:(k + 1) * half, :] = s
        acc = jnp.dot(w_ref_[...], stack_ref[...], preferred_element_type=f32)
        return silu(acc + b_ref_[...])

    s1 = cbs3x3(c2, w1_ref, b1_ref)
    s2 = cbs3x3(s1, w2_ref, b2_ref)
    s3 = cbs3x3(s2, w3_ref, b3_ref)
    s4 = cbs3x3(s3, w4_ref, b4_ref)

    # --- final 1x1 CBS over concat([s4, s2, c2, c1]) in ONE matmul -----------
    stack_ref[0 * half:1 * half, :] = s4
    stack_ref[1 * half:2 * half, :] = s2
    stack_ref[2 * half:3 * half, :] = c2
    stack_ref[3 * half:4 * half, :] = c1
    y = jnp.dot(wf_ref[...], stack_ref[0:4 * half, :],
                preferred_element_type=f32) + bf_ref[...]
    o_ref[0] = silu(y).astype(o_ref.dtype)


# -----------------------------------------------------------------------------
# Wrapper
# -----------------------------------------------------------------------------
def _elan_apply(x, params):
    bs, cin, H, W = x.shape
    half = cin // 2
    S = H * W
    P = W + 1
    cout = params["wf"].shape[0]

    x_flat = x.reshape(bs, cin, S)                 # free reshape (NCHW kept)

    # Column-validity masks for the dx = -1 / +1 taps of the 3x3 convs.
    w_col = jnp.arange(S, dtype=jnp.int32) % W
    col_mask = jnp.stack([(w_col > 0), (w_col < W - 1)]).astype(jnp.float32)

    names = ("wtd", "btd", "w1", "b1", "w2", "b2",
             "w3", "b3", "w4", "b4", "wf", "bf")
    operands = [x_flat] + [params[n] for n in names] + [col_mask]

    in_specs = [pl.BlockSpec((1, cin, S), lambda b: (b, 0, 0))]
    for n in names:                                # resident, constant blocks
        shp = params[n].shape
        in_specs.append(pl.BlockSpec(shp, lambda b, _nd=len(shp): (0,) * _nd))
    in_specs.append(pl.BlockSpec((2, S), lambda b: (0, 0)))

    # Advisory cost estimate for the XLA scheduler.
    flops = bs * (2 * (2 * half) * cin * S
                  + 4 * 2 * half * (9 * half) * S
                  + 2 * cout * (4 * half) * S)
    transcendentals = bs * (6 * half + cout) * S
    weight_bytes = 4 * sum(int(params[n].size) for n in names)
    bytes_accessed = 4 * bs * (cin + cout) * S + weight_bytes + 4 * 2 * S

    kernel = functools.partial(_elan_kernel, H=H, W=W, half=half)

    y_flat = pl.pallas_call(
        kernel,
        out_shape=jax.ShapeDtypeStruct((bs, cout, S), jnp.float32),
        grid_spec=pltpu.PrefetchScalarGridSpec(
            num_scalar_prefetch=0,
            grid=(bs,),
            in_specs=in_specs,
            out_specs=pl.BlockSpec((1, cout, S), lambda b: (b, 0, 0)),
            scratch_shapes=[
                pltpu.VMEM((half, S + 2 * P), jnp.float32),   # padded map
                pltpu.VMEM((9 * half, S), jnp.float32),       # tap/concat stack
            ],
        ),
        compiler_params=pltpu.CompilerParams(
            dimension_semantics=("parallel",)),
        cost_estimate=pl.CostEstimate(
            flops=int(flops),
            transcendentals=int(transcendentals),
            bytes_accessed=int(bytes_accessed)),
    )(*operands)

    return y_flat.reshape(bs, cout, H, W)


class ELANPallas:
    """JAX/Pallas re-implementation of the YOLOv7 ELAN block (inference)."""

    def __init__(self, in_c, f=False, *, key):
        assert in_c % 2 == 0
        self.in_c = in_c
        half = in_c // 2
        out_f = in_c if f else 2 * in_c

        layer_defs = [
            ("t", in_c, half, 1),       # partialc_t : 1x1
            ("d", in_c, half, 1),       # partialc_d : 1x1
            ("b1", half, half, 3),      # block_1..4 : 3x3
            ("b2", half, half, 3),
            ("b3", half, half, 3),
            ("b4", half, half, 3),
            ("final", 2 * in_c, out_f, 1),
        ]
        self.raw = {}
        for name, ci, co, k in layer_defs:
            key, kw, kg, kb, km, kv = jax.random.split(key, 6)
            bound = 1.0 / float(ci * k * k) ** 0.5
            self.raw[name] = dict(
                w=jax.random.uniform(kw, (co, ci, k, k), jnp.float32, -bound, bound),
                gamma=1.0 + 0.1 * jax.random.normal(kg, (co,), jnp.float32),
                beta=0.1 * jax.random.normal(kb, (co,), jnp.float32),
                mean=0.1 * jax.random.normal(km, (co,), jnp.float32),
                var=jnp.abs(1.0 + 0.1 * jax.random.normal(kv, (co,), jnp.float32)),
            )

        def fold(name):
            r = self.raw[name]
            scale = r["gamma"] / jnp.sqrt(r["var"] + 1e-5)
            return r["w"] * scale[:, None, None, None], r["beta"] - r["mean"] * scale

        p = {}
        # Both 1x1 branches stacked into a single (2*half, cin) weight.
        wt, bt = fold("t")
        wd, bd = fold("d")
        p["wtd"] = jnp.concatenate(
            [wt.reshape(half, in_c), wd.reshape(half, in_c)], axis=0)
        p["btd"] = jnp.concatenate([bt, bd], axis=0).reshape(-1, 1)
        # 3x3 convs: (co, ci, 3, 3) -> (co, 3, 3, ci) -> (co, 9*ci),
        # tap k = (ky*3 + kx) occupies columns [k*ci, (k+1)*ci).
        for i in range(1, 5):
            w_eff, b_eff = fold(f"b{i}")
            co, ci = w_eff.shape[0], w_eff.shape[1]
            p[f"w{i}"] = jnp.transpose(w_eff, (0, 2, 3, 1)).reshape(co, 9 * ci)
            p[f"b{i}"] = b_eff.reshape(-1, 1)
        w_eff, b_eff = fold("final")
        p["wf"] = w_eff.reshape(w_eff.shape[0], w_eff.shape[1])
        p["bf"] = b_eff.reshape(-1, 1)

        self.params = p
        self._apply = jax.jit(_elan_apply)

    def __call__(self, x):
        return self._apply(x, self.params)


# -----------------------------------------------------------------------------
# Pure-JAX reference (raw conv + explicit BN + SiLU), for a sanity check
# -----------------------------------------------------------------------------
def _cbs_ref(v, raw):
    w = raw["w"]
    pad = w.shape[-1] // 2
    y = jax.lax.conv_general_dilated(
        v, w, window_strides=(1, 1),
        padding=[(pad, pad), (pad, pad)],
        dimension_numbers=("NCHW", "OIHW", "NCHW"))
    scale = (raw["gamma"] / jnp.sqrt(raw["var"] + 1e-5)).reshape(1, -1, 1, 1)
    y = (y - raw["mean"].reshape(1, -1, 1, 1)) * scale + raw["beta"].reshape(1, -1, 1, 1)
    return y * jax.nn.sigmoid(y)


def _elan_ref(x, raw):
    c1 = _cbs_ref(x, raw["t"])
    c2 = _cbs_ref(x, raw["d"])
    s1 = _cbs_ref(c2, raw["b1"])
    s2 = _cbs_ref(s1, raw["b2"])
    s3 = _cbs_ref(s2, raw["b3"])
    s4 = _cbs_ref(s3, raw["b4"])
    cat = jnp.concatenate([s4, s2, c2, c1], axis=1)
    return _cbs_ref(cat, raw["final"])


if __name__ == "__main__":
    key = jax.random.PRNGKey(0)
    key, k_init, kx = jax.random.split(key, 3)

    in_c, bs, H, W = 16, 2, 16, 16
    elan = ELANPallas(in_c, f=False, key=k_init)
    x = jax.random.normal(kx, (bs, in_c, H, W), jnp.float32)

    out = jax.block_until_ready(elan(x))
    assert out.shape == (bs, 2 * in_c, H, W), out.shape

    with jax.default_matmul_precision("float32"):
        ref = jax.block_until_ready(_elan_ref(x, elan.raw))
    max_err = float(jnp.max(jnp.abs(out - ref)))
    # tolerance covers MXU bf16-pass reassociation across the 7 chained convs
    assert jnp.allclose(out, ref, atol=2e-2, rtol=2e-2), max_err

    print("KERNEL_OK")
</pallas_src>

<mosaic_0001>
module attributes {stable_mosaic.version = 11 : i64} {
  func.func @_elan_kernel(%arg0: i32, %arg1: memref<1x16x256xf32, #tpu.memory_space<vmem>>, %arg2: memref<16x16xf32, #tpu.memory_space<vmem>>, %arg3: memref<16x1xf32, #tpu.memory_space<vmem>>, %arg4: memref<8x72xf32, #tpu.memory_space<vmem>>, %arg5: memref<8x1xf32, #tpu.memory_space<vmem>>, %arg6: memref<8x72xf32, #tpu.memory_space<vmem>>, %arg7: memref<8x1xf32, #tpu.memory_space<vmem>>, %arg8: memref<8x72xf32, #tpu.memory_space<vmem>>, %arg9: memref<8x1xf32, #tpu.memory_space<vmem>>, %arg10: memref<8x72xf32, #tpu.memory_space<vmem>>, %arg11: memref<8x1xf32, #tpu.memory_space<vmem>>, %arg12: memref<32x32xf32, #tpu.memory_space<vmem>>, %arg13: memref<32x1xf32, #tpu.memory_space<vmem>>, %arg14: memref<2x256xf32, #tpu.memory_space<vmem>>, %arg15: memref<1x32x256xf32, #tpu.memory_space<vmem>>, %arg16: memref<8x290xf32, #tpu.memory_space<vmem>>, %arg17: memref<72x256xf32, #tpu.memory_space<vmem>>) attributes {dimension_semantics = [#tpu.dimension_semantics<parallel>], iteration_bounds = array<i64: 2>, scalar_prefetch = 0 : i64, scratch_operands = 2 : i64, tpu.core_type = #tpu.core_type<tc>, window_params = [{transform_indices = @transform_0, window_bounds = array<i64: 1, 16, 256>}, {pipeline_mode = #tpu.pipeline_mode<synchronous>, transform_indices = @transform_1, window_bounds = array<i64: 16, 16>}, {pipeline_mode = #tpu.pipeline_mode<synchronous>, transform_indices = @transform_2, window_bounds = array<i64: 16, 1>}, {pipeline_mode = #tpu.pipeline_mode<synchronous>, transform_indices = @transform_3, window_bounds = array<i64: 8, 72>}, {pipeline_mode = #tpu.pipeline_mode<synchronous>, transform_indices = @transform_4, window_bounds = array<i64: 8, 1>}, {pipeline_mode = #tpu.pipeline_mode<synchronous>, transform_indices = @transform_5, window_bounds = array<i64: 8, 72>}, {pipeline_mode = #tpu.pipeline_mode<synchronous>, transform_indices = @transform_6, window_bounds = array<i64: 8, 1>}, {pipeline_mode = #tpu.pipeline_mode<synchronous>, transform_indices = @transform_7, window_bounds = array<i64: 8, 72>}, {pipeline_mode = #tpu.pipeline_mode<synchronous>, transform_indices = @transform_8, window_bounds = array<i64: 8, 1>}, {pipeline_mode = #tpu.pipeline_mode<synchronous>, transform_indices = @transform_9, window_bounds = array<i64: 8, 72>}, {pipeline_mode = #tpu.pipeline_mode<synchronous>, transform_indices = @transform_10, window_bounds = array<i64: 8, 1>}, {pipeline_mode = #tpu.pipeline_mode<synchronous>, transform_indices = @transform_11, window_bounds = array<i64: 32, 32>}, {pipeline_mode = #tpu.pipeline_mode<synchronous>, transform_indices = @transform_12, window_bounds = array<i64: 32, 1>}, {pipeline_mode = #tpu.pipeline_mode<synchronous>, transform_indices = @transform_13, window_bounds = array<i64: 2, 256>}, {transform_indices = @transform_14, window_bounds = array<i64: 1, 32, 256>}]} {
    %cst = arith.constant 0.000000e+00 : f32
    %0 = vector.broadcast %cst : f32 to vector<8x290xf32>
    %c0 = arith.constant 0 : index
    %c0_0 = arith.constant 0 : index
    %1 = vector.load %arg16[%c0, %c0_0] : memref<8x290xf32, #tpu.memory_space<vmem>>, vector<8x290xf32>
    tpu.vector_store %arg16[%c0, %c0_0], %0 {strides = array<i32>} : memref<8x290xf32, #tpu.memory_space<vmem>>, vector<8x290xf32>,
    %c0_1 = arith.constant 0 : index
    %c0_2 = arith.constant 0 : index
    %c0_3 = arith.constant 0 : index
    %2 = vector.load %arg1[%c0_1, %c0_2, %c0_3] : memref<1x16x256xf32, #tpu.memory_space<vmem>>, vector<1x16x256xf32>
    %3 = vector.shape_cast %2 : vector<1x16x256xf32> to vector<16x256xf32>
    %c0_4 = arith.constant 0 : index
    %c0_5 = arith.constant 0 : index
    %4 = vector.load %arg14[%c0_4, %c0_5] : memref<2x256xf32, #tpu.memory_space<vmem>>, vector<1x256xf32>
    %c1 = arith.constant 1 : index
    %c0_6 = arith.constant 0 : index
    %5 = vector.load %arg14[%c1, %c0_6] : memref<2x256xf32, #tpu.memory_space<vmem>>, vector<1x256xf32>
    %c0_7 = arith.constant 0 : index
    %c0_8 = arith.constant 0 : index
    %6 = vector.load %arg2[%c0_7, %c0_8] : memref<16x16xf32, #tpu.memory_space<vmem>>, vector<16x16xf32>
    %cst_9 = arith.constant dense<0.000000e+00> : vector<16x256xf32>
    %7 = tpu.matmul %6, %3, %cst_9 {dimension_numbers = #tpu.dot_dimension_numbers<[1], [0], [0], [1], [0, 0, 1, 1], [], []>} : vector<16x16xf32>, vector<16x256xf32>, vector<16x256xf32> -> vector<16x256xf32>
    %c0_10 = arith.constant 0 : index
    %c0_11 = arith.constant 0 : index
    %8 = vector.load %arg3[%c0_10, %c0_11] : memref<16x1xf32, #tpu.memory_space<vmem>>, vector<16x1xf32>
    %9 = vector.broadcast %8 : vector<16x1xf32> to vector<16x256xf32>
    %10 = arith.addf %7, %9 : vector<16x256xf32>
    %cst_12 = arith.constant 0.000000e+00 : f32
    %11 = vector.broadcast %cst_12 : f32 to vector<16x256xf32>
    %12 = arith.subf %11, %10 : vector<16x256xf32>
    %13 = math.exp %12 : vector<16x256xf32>
    %cst_13 = arith.constant 1.000000e+00 : f32
    %14 = vector.broadcast %cst_13 : f32 to vector<16x256xf32>
    %15 = arith.addf %14, %13 : vector<16x256xf32>
    %cst_14 = arith.constant 1.000000e+00 : f32
    %16 = vector.broadcast %cst_14 : f32 to vector<16x256xf32>
    %17 = arith.divf %16, %15 : vector<16x256xf32>
    %18 = arith.mulf %10, %17 : vector<16x256xf32>
    %19 = vector.extract_strided_slice %18 {offsets = [0, 0], sizes = [8, 256], strides = [1, 1]} : vector<16x256xf32> to vector<8x256xf32>
    %20 = vector.extract_strided_slice %18 {offsets = [8, 0], sizes = [8, 256], strides = [1, 1]} : vector<16x256xf32> to vector<8x256xf32>
    %c0_15 = arith.constant 0 : index
    %c17 = arith.constant 17 : index
    %21 = vector.load %arg16[%c0_15, %c17] : memref<8x290xf32, #tpu.memory_space<vmem>>, vector<8x256xf32>
    tpu.vector_store %arg16[%c0_15, %c17], %20 {strides = array<i32>} : memref<8x290xf32, #tpu.memory_space<vmem>>, vector<8x256xf32>,
    %c0_16 = arith.constant 0 : index
    %c0_17 = arith.constant 0 : index
    %22 = vector.load %arg16[%c0_16, %c0_17] : memref<8x290xf32, #tpu.memory_space<vmem>>, vector<8x256xf32>
    %23 = vector.broadcast %4 : vector<1x256xf32> to vector<8x256xf32>
    %24 = arith.mulf %22, %23 : vector<8x256xf32>
    %c0_18 = arith.constant 0 : index
    %c0_19 = arith.constant 0 : index
    %25 = vector.load %arg17[%c0_18, %c0_19] : memref<72x256xf32, #tpu.memory_space<vmem>>, vector<8x256xf32>
    tpu.vector_store %arg17[%c0_18, %c0_19], %24 {strides = array<i32>} : memref<72x256xf32, #tpu.memory_space<vmem>>, vector<8x256xf32>,
    %c0_20 = arith.constant 0 : index
    %c1_21 = arith.constant 1 : index
    %26 = vector.load %arg16[%c0_20, %c1_21] : memref<8x290xf32, #tpu.memory_space<vmem>>, vector<8x256xf32>
    %c8 = arith.constant 8 : index
    %c0_22 = arith.constant 0 : index
    %27 = vector.load %arg17[%c8, %c0_22] : memref<72x256xf32, #tpu.memory_space<vmem>>, vector<8x256xf32>
    tpu.vector_store %arg17[%c8, %c0_22], %26 {strides = array<i32>} : memref<72x256xf32, #tpu.memory_space<vmem>>, vector<8x256xf32>,
    %c0_23 = arith.constant 0 : index
    %c2 = arith.constant 2 : index
    %28 = vector.load %arg16[%c0_23, %c2] : memref<8x290xf32, #tpu.memory_space<vmem>>, vector<8x256xf32>
    %29 = vector.broadcast %5 : vector<1x256xf32> to vector<8x256xf32>
    %30 = arith.mulf %28, %29 : vector<8x256xf32>
    %c16 = arith.constant 16 : index
    %c0_24 = arith.constant 0 : index
    %31 = vector.load %arg17[%c16, %c0_24] : memref<72x256xf32, #tpu.memory_space<vmem>>, vector<8x256xf32>
    tpu.vector_store %arg17[%c16, %c0_24], %30 {strides = array<i32>} : memref<72x256xf32, #tpu.memory_space<vmem>>, vector<8x256xf32>,
    %c0_25 = arith.constant 0 : index
    %c16_26 = arith.constant 16 : index
    %32 = vector.load %arg16[%c0_25, %c16_26] : memref<8x290xf32, #tpu.memory_space<vmem>>, vector<8x256xf32>
    %33 = vector.broadcast %4 : vector<1x256xf32> to vector<8x256xf32>
    %34 = arith.mulf %32, %33 : vector<8x256xf32>
    %c24 = arith.constant 24 : index
    %c0_27 = arith.constant 0 : index
    %35 = vector.load %arg17[%c24, %c0_27] : memref<72x256xf32, #tpu.memory_space<vmem>>, vector<8x256xf32>
    tpu.vector_store %arg17[%c24, %c0_27], %34 {strides = array<i32>} : memref<72x256xf32, #tpu.memory_space<vmem>>, vector<8x256xf32>,
    %c0_28 = arith.constant 0 : index
    %c17_29 = arith.constant 17 : index
    %36 = vector.load %arg16[%c0_28, %c17_29] : memref<8x290xf32, #tpu.memory_space<vmem>>, vector<8x256xf32>
    %c32 = arith.constant 32 : index
    %c0_30 = arith.constant 0 : index
    %37 = vector.load %arg17[%c32, %c0_30] : memref<72x256xf32, #tpu.memory_space<vmem>>, vector<8x256xf32>
    tpu.vector_store %arg17[%c32, %c0_30], %36 {strides = array<i32>} : memref<72x256xf32, #tpu.memory_space<vmem>>, vector<8x256xf32>,
    %c0_31 = arith.constant 0 : index
    %c18 = arith.constant 18 : index
    %38 = vector.load %arg16[%c0_31, %c18] : memref<8x290xf32, #tpu.memory_space<vmem>>, vector<8x256xf32>
    %39 = vector.broadcast %5 : vector<1x256xf32> to vector<8x256xf32>
    %40 = arith.mulf %38, %39 : vector<8x256xf32>
    %c40 = arith.constant 40 : index
    %c0_32 = arith.constant 0 : index
    %41 = vector.load %arg17[%c40, %c0_32] : memref<72x256xf32, #tpu.memory_space<vmem>>, vector<8x256xf32>
    tpu.vector_store %arg17[%c40, %c0_32], %40 {strides = array<i32>} : memref<72x256xf32, #tpu.memory_space<vmem>>, vector<8x256xf32>,
    %c0_33 = arith.constant 0 : index
    %c32_34 = arith.constant 32 : index
    %42 = vector.load %arg16[%c0_33, %c32_34] : memref<8x290xf32, #tpu.memory_space<vmem>>, vector<8x256xf32>
    %43 = vector.broadcast %4 : vector<1x256xf32> to vector<8x256xf32>
    %44 = arith.mulf %42, %43 : vector<8x256xf32>
    %c48 = arith.constant 48 : index
    %c0_35 = arith.constant 0 : index
    %45 = vector.load %arg17[%c48, %c0_35] : memref<72x256xf32, #tpu.memory_space<vmem>>, vector<8x256xf32>
    tpu.vector_store %arg17[%c48, %c0_35], %44 {strides = array<i32>} : memref<72x256xf32, #tpu.memory_space<vmem>>, vector<8x256xf32>,
    %c0_36 = arith.constant 0 : index
    %c33 = arith.constant 33 : index
    %46 = vector.load %arg16[%c0_36, %c33] : memref<8x290xf32, #tpu.memory_space<vmem>>, vector<8x256xf32>
    %c56 = arith.constant 56 : index
    %c0_37 = arith.constant 0 : index
    %47 = vector.load %arg17[%c56, %c0_37] : memref<72x256xf32, #tpu.memory_space<vmem>>, vector<8x256xf32>
    tpu.vector_store %arg17[%c56, %c0_37], %46 {strides = array<i32>} : memref<72x256xf32, #tpu.memory_space<vmem>>, vector<8x256xf32>,
    %c0_38 = arith.constant 0 : index
    %c34 = arith.constant 34 : index
    %48 = vector.load %arg16[%c0_38, %c34] : memref<8x290xf32, #tpu.memory_space<vmem>>, vector<8x256xf32>
    %49 = vector.broadcast %5 : vector<1x256xf32> to vector<8x256xf32>
    %50 = arith.mulf %48, %49 : vector<8x256xf32>
    %c64 = arith.constant 64 : index
    %c0_39 = arith.constant 0 : index
    %51 = vector.load %arg17[%c64, %c0_39] : memref<72x256xf32, #tpu.memory_space<vmem>>, vector<8x256xf32>
    tpu.vector_store %arg17[%c64, %c0_39], %50 {strides = array<i32>} : memref<72x256xf32, #tpu.memory_space<vmem>>, vector<8x256xf32>,
    %c0_40 = arith.constant 0 : index
    %c0_41 = arith.constant 0 : index
    %52 = vector.load %arg4[%c0_40, %c0_41] : memref<8x72xf32, #tpu.memory_space<vmem>>, vector<8x72xf32>
    %c0_42 = arith.constant 0 : index
    %c0_43 = arith.constant 0 : index
    %53 = vector.load %arg17[%c0_42, %c0_43] : memref<72x256xf32, #tpu.memory_space<vmem>>, vector<72x256xf32>
    %cst_44 = arith.constant dense<0.000000e+00> : vector<8x256xf32>
    %54 = tpu.matmul %52, %53, %cst_44 {dimension_numbers = #tpu.dot_dimension_numbers<[1], [0], [0], [1], [0, 0, 1, 1], [], []>} : vector<8x72xf32>, vector<72x256xf32>, vector<8x256xf32> -> vector<8x256xf32>
    %c0_45 = arith.constant 0 : index
    %c0_46 = arith.constant 0 : index
    %55 = vector.load %arg5[%c0_45, %c0_46] : memref<8x1xf32, #tpu.memory_space<vmem>>, vector<8x1xf32>
    %56 = vector.broadcast %55 : vector<8x1xf32> to vector<8x256xf32>
    %57 = arith.addf %54, %56 : vector<8x256xf32>
    %cst_47 = arith.constant 0.000000e+00 : f32
    %58 = vector.broadcast %cst_47 : f32 to vector<8x256xf32>
    %59 = arith.subf %58, %57 : vector<8x256xf32>
    %60 = math.exp %59 : vector<8x256xf32>
    %cst_48 = arith.constant 1.000000e+00 : f32
    %61 = vector.broadcast %cst_48 : f32 to vector<8x256xf32>
    %62 = arith.addf %61, %60 : vector<8x256xf32>
    %cst_49 = arith.constant 1.000000e+00 : f32
    %63 = vector.broadcast %cst_49 : f32 to vector<8x256xf32>
    %64 = arith.divf %63, %62 : vector<8x256xf32>
    %65 = arith.mulf %57, %64 : vector<8x256xf32>
    %c0_50 = arith.constant 0 : index
    %c17_51 = arith.constant 17 : index
    %66 = vector.load %arg16[%c0_50, %c17_51] : memref<8x290xf32, #tpu.memory_space<vmem>>, vector<8x256xf32>
    tpu.vector_store %arg16[%c0_50, %c17_51], %65 {strides = array<i32>} : memref<8x290xf32, #tpu.memory_space<vmem>>, vector<8x256xf32>,
    %c0_52 = arith.constant 0 : index
    %c0_53 = arith.constant 0 : index
    %67 = vector.load %arg16[%c0_52, %c0_53] : memref<8x290xf32, #tpu.memory_space<vmem>>, vector<8x256xf32>
    %68 = vector.broadcast %4 : vector<1x256xf32> to vector<8x256xf32>
    %69 = arith.mulf %67, %68 : vector<8x256xf32>
    %c0_54 = arith.constant 0 : index
    %c0_55 = arith.constant 0 : index
    %70 = vector.load %arg17[%c0_54, %c0_55] : memref<72x256xf32, #tpu.memory_space<vmem>>, vector<8x256xf32>
    tpu.vector_store %arg17[%c0_54, %c0_55], %69 {strides = array<i32>} : memref<72x256xf32, #tpu.memory_space<vmem>>, vector<8x256xf32>,
    %c0_56 = arith.constant 0 : index
    %c1_57 = arith.constant 1 : index
    %71 = vector.load %arg16[%c0_56, %c1_57] : memref<8x290xf32, #tpu.memory_space<vmem>>, vector<8x256xf32>
    %c8_58 = arith.constant 8 : index
    %c0_59 = arith.constant 0 : index
    %72 = vector.load %arg17[%c8_58, %c0_59] : memref<72x256xf32, #tpu.memory_space<vmem>>, vector<8x256xf32>
    tpu.vector_store %arg17[%c8_58, %c0_59], %71 {strides = array<i32>} : memref<72x256xf32, #tpu.memory_space<vmem>>, vector<8x256xf32>,
    %c0_60 = arith.constant 0 : index
    %c2_61 = arith.constant 2 : index
    %73 = vector.load %arg16[%c0_60, %c2_61] : memref<8x290xf32, #tpu.memory_space<vmem>>, vector<8x256xf32>
    %74 = vector.broadcast %5 : vector<1x256xf32> to vector<8x256xf32>
    %75 = arith.mulf %73, %74 : vector<8x256xf32>
    %c16_62 = arith.constant 16 : index
    %c0_63 = arith.constant 0 : index
    %76 = vector.load %arg17[%c16_62, %c0_63] : memref<72x256xf32, #tpu.memory_space<vmem>>, vector<8x256xf32>
    tpu.vector_store %arg17[%c16_62, %c0_63], %75 {strides = array<i32>} : memref<72x256xf32, #tpu.memory_space<vmem>>, vector<8x256xf32>,
    %c0_64 = arith.constant 0 : index
    %c16_65 = arith.constant 16 : index
    %77 = vector.load %arg16[%c0_64, %c16_65] : memref<8x290xf32, #tpu.memory_space<vmem>>, vector<8x256xf32>
    %78 = vector.broadcast %4 : vector<1x256xf32> to vector<8x256xf32>
    %79 = arith.mulf %77, %78 : vector<8x256xf32>
    %c24_66 = arith.constant 24 : index
    %c0_67 = arith.constant 0 : index
    %80 = vector.load %arg17[%c24_66, %c0_67] : memref<72x256xf32, #tpu.memory_space<vmem>>, vector<8x256xf32>
    tpu.vector_store %arg17[%c24_66, %c0_67], %79 {strides = array<i32>} : memref<72x256xf32, #tpu.memory_space<vmem>>, vector<8x256xf32>,
    %c0_68 = arith.constant 0 : index
    %c17_69 = arith.constant 17 : index
    %81 = vector.load %arg16[%c0_68, %c17_69] : memref<8x290xf32, #tpu.memory_space<vmem>>, vector<8x256xf32>
    %c32_70 = arith.constant 32 : index
    %c0_71 = arith.constant 0 : index
    %82 = vector.load %arg17[%c32_70, %c0_71] : memref<72x256xf32, #tpu.memory_space<vmem>>, vector<8x256xf32>
    tpu.vector_store %arg17[%c32_70, %c0_71], %81 {strides = array<i32>} : memref<72x256xf32, #tpu.memory_space<vmem>>, vector<8x256xf32>,
    %c0_72 = arith.constant 0 : index
    %c18_73 = arith.constant 18 : index
    %83 = vector.load %arg16[%c0_72, %c18_73] : memref<8x290xf32, #tpu.memory_space<vmem>>, vector<8x256xf32>
    %84 = vector.broadcast %5 : vector<1x256xf32> to vector<8x256xf32>
    %85 = arith.mulf %83, %84 : vector<8x256xf32>
    %c40_74 = arith.constant 40 : index
    %c0_75 = arith.constant 0 : index
    %86 = vector.load %arg17[%c40_74, %c0_75] : memref<72x256xf32, #tpu.memory_space<vmem>>, vector<8x256xf32>
    tpu.vector_store %arg17[%c40_74, %c0_75], %85 {strides = array<i32>} : memref<72x256xf32, #tpu.memory_space<vmem>>, vector<8x256xf32>,
    %c0_76 = arith.constant 0 : index
    %c32_77 = arith.constant 32 : index
    %87 = vector.load %arg16[%c0_76, %c32_77] : memref<8x290xf32, #tpu.memory_space<vmem>>, vector<8x256xf32>
    %88 = vector.broadcast %4 : vector<1x256xf32> to vector<8x256xf32>
    %89 = arith.mulf %87, %88 : vector<8x256xf32>
    %c48_78 = arith.constant 48 : index
    %c0_79 = arith.constant 0 : index
    %90 = vector.load %arg17[%c48_78, %c0_79] : memref<72x256xf32, #tpu.memory_space<vmem>>, vector<8x256xf32>
    tpu.vector_store %arg17[%c48_78, %c0_79], %89 {strides = array<i32>} : memref<72x256xf32, #tpu.memory_space<vmem>>, vector<8x256xf32>,
    %c0_80 = arith.constant 0 : index
    %c33_81 = arith.constant 33 : index
    %91 = vector.load %arg16[%c0_80, %c33_81] : memref<8x290xf32, #tpu.memory_space<vmem>>, vector<8x256xf32>
    %c56_82 = arith.constant 56 : index
    %c0_83 = arith.constant 0 : index
    %92 = vector.load %arg17[%c56_82, %c0_83] : memref<72x256xf32, #tpu.memory_space<vmem>>, vector<8x256xf32>
    tpu.vector_store %arg17[%c56_82, %c0_83], %91 {strides = array<i32>} : memref<72x256xf32, #tpu.memory_space<vmem>>, vector<8x256xf32>,
    %c0_84 = arith.constant 0 : index
    %c34_85 = arith.constant 34 : index
    %93 = vector.load %arg16[%c0_84, %c34_85] : memref<8x290xf32, #tpu.memory_space<vmem>>, vector<8x256xf32>
    %94 = vector.broadcast %5 : vector<1x256xf32> to vector<8x256xf32>
    %95 = arith.mulf %93, %94 : vector<8x256xf32>
    %c64_86 = arith.constant 64 : index
    %c0_87 = arith.constant 0 : index
    %96 = vector.load %arg17[%c64_86, %c0_87] : memref<72x256xf32, #tpu.memory_space<vmem>>, vector<8x256xf32>
    tpu.vector_store %arg17[%c64_86, %c0_87], %95 {strides = array<i32>} : memref<72x256xf32, #tpu.memory_space<vmem>>, vector<8x256xf32>,
    %c0_88 = arith.constant 0 : index
    %c0_89 = arith.constant 0 : index
    %97 = vector.load %arg6[%c0_88, %c0_89] : memref<8x72xf32, #tpu.memory_space<vmem>>, vector<8x72xf32>
    %c0_90 = arith.constant 0 : index
    %c0_91 = arith.constant 0 : index
    %98 = vector.load %arg17[%c0_90, %c0_91] : memref<72x256xf32, #tpu.memory_space<vmem>>, vector<72x256xf32>
    %cst_92 = arith.constant dense<0.000000e+00> : vector<8x256xf32>
    %99 = tpu.matmul %97, %98, %cst_92 {dimension_numbers = #tpu.dot_dimension_numbers<[1], [0], [0], [1], [0, 0, 1, 1], [], []>} : vector<8x72xf32>, vector<72x256xf32>, vector<8x256xf32> -> vector<8x256xf32>
    %c0_93 = arith.constant 0 : index
    %c0_94 = arith.constant 0 : index
    %100 = vector.load %arg7[%c0_93, %c0_94] : memref<8x1xf32, #tpu.memory_space<vmem>>, vector<8x1xf32>
    %101 = vector.broadcast %100 : vector<8x1xf32> to vector<8x256xf32>
    %102 = arith.addf %99, %101 : vector<8x256xf32>
    %cst_95 = arith.constant 0.000000e+00 : f32
    %103 = vector.broadcast %cst_95 : f32 to vector<8x256xf32>
    %104 = arith.subf %103, %102 : vector<8x256xf32>
    %105 = math.exp %104 : vector<8x256xf32>
    %cst_96 = arith.constant 1.000000e+00 : f32
    %106 = vector.broadcast %cst_96 : f32 to vector<8x256xf32>
    %107 = arith.addf %106, %105 : vector<8x256xf32>
    %cst_97 = arith.constant 1.000000e+00 : f32
    %108 = vector.broadcast %cst_97 : f32 to vector<8x256xf32>
    %109 = arith.divf %108, %107 : vector<8x256xf32>
    %110 = arith.mulf %102, %109 : vector<8x256xf32>
    %c0_98 = arith.constant 0 : index
    %c17_99 = arith.constant 17 : index
    %111 = vector.load %arg16[%c0_98, %c17_99] : memref<8x290xf32, #tpu.memory_space<vmem>>, vector<8x256xf32>
    tpu.vector_store %arg16[%c0_98, %c17_99], %110 {strides = array<i32>} : memref<8x290xf32, #tpu.memory_space<vmem>>, vector<8x256xf32>,
    %c0_100 = arith.constant 0 : index
    %c0_101 = arith.constant 0 : index
    %112 = vector.load %arg16[%c0_100, %c0_101] : memref<8x290xf32, #tpu.memory_space<vmem>>, vector<8x256xf32>
    %113 = vector.broadcast %4 : vector<1x256xf32> to vector<8x256xf32>
    %114 = arith.mulf %112, %113 : vector<8x256xf32>
    %c0_102 = arith.constant 0 : index
    %c0_103 = arith.constant 0 : index
    %115 = vector.load %arg17[%c0_102, %c0_103] : memref<72x256xf32, #tpu.memory_space<vmem>>, vector<8x256xf32>
    tpu.vector_store %arg17[%c0_102, %c0_103], %114 {strides = array<i32>} : memref<72x256xf32, #tpu.memory_space<vmem>>, vector<8x256xf32>,
    %c0_104 = arith.constant 0 : index
    %c1_105 = arith.constant 1 : index
    %116 = vector.load %arg16[%c0_104, %c1_105] : memref<8x290xf32, #tpu.memory_space<vmem>>, vector<8x256xf32>
    %c8_106 = arith.constant 8 : index
    %c0_107 = arith.constant 0 : index
    %117 = vector.load %arg17[%c8_106, %c0_107] : memref<72x256xf32, #tpu.memory_space<vmem>>, vector<8x256xf32>
    tpu.vector_store %arg17[%c8_106, %c0_107], %116 {strides = array<i32>} : memref<72x256xf32, #tpu.memory_space<vmem>>, vector<8x256xf32>,
    %c0_108 = arith.constant 0 : index
    %c2_109 = arith.constant 2 : index
    %118 = vector.load %arg16[%c0_108, %c2_109] : memref<8x290xf32, #tpu.memory_space<vmem>>, vector<8x256xf32>
    %119 = vector.broadcast %5 : vector<1x256xf32> to vector<8x256xf32>
    %120 = arith.mulf %118, %119 : vector<8x256xf32>
    %c16_110 = arith.constant 16 : index
    %c0_111 = arith.constant 0 : index
    %121 = vector.load %arg17[%c16_110, %c0_111] : memref<72x256xf32, #tpu.memory_space<vmem>>, vector<8x256xf32>
    tpu.vector_store %arg17[%c16_110, %c0_111], %120 {strides = array<i32>} : memref<72x256xf32, #tpu.memory_space<vmem>>, vector<8x256xf32>,
    %c0_112 = arith.constant 0 : index
    %c16_113 = arith.constant 16 : index
    %122 = vector.load %arg16[%c0_112, %c16_113] : memref<8x290xf32, #tpu.memory_space<vmem>>, vector<8x256xf32>
    %123 = vector.broadcast %4 : vector<1x256xf32> to vector<8x256xf32>
    %124 = arith.mulf %122, %123 : vector<8x256xf32>
    %c24_114 = arith.constant 24 : index
    %c0_115 = arith.constant 0 : index
    %125 = vector.load %arg17[%c24_114, %c0_115] : memref<72x256xf32, #tpu.memory_space<vmem>>, vector<8x256xf32>
    tpu.vector_store %arg17[%c24_114, %c0_115], %124 {strides = array<i32>} : memref<72x256xf32, #tpu.memory_space<vmem>>, vector<8x256xf32>,
    %c0_116 = arith.constant 0 : index
    %c17_117 = arith.constant 17 : index
    %126 = vector.load %arg16[%c0_116, %c17_117] : memref<8x290xf32, #tpu.memory_space<vmem>>, vector<8x256xf32>
    %c32_118 = arith.constant 32 : index
    %c0_119 = arith.constant 0 : index
    %127 = vector.load %arg17[%c32_118, %c0_119] : memref<72x256xf32, #tpu.memory_space<vmem>>, vector<8x256xf32>
    tpu.vector_store %arg17[%c32_118, %c0_119], %126 {strides = array<i32>} : memref<72x256xf32, #tpu.memory_space<vmem>>, vector<8x256xf32>,
    %c0_120 = arith.constant 0 : index
    %c18_121 = arith.constant 18 : index
    %128 = vector.load %arg16[%c0_120, %c18_121] : memref<8x290xf32, #tpu.memory_space<vmem>>, vector<8x256xf32>
    %129 = vector.broadcast %5 : vector<1x256xf32> to vector<8x256xf32>
    %130 = arith.mulf %128, %129 : vector<8x256xf32>
    %c40_122 = arith.constant 40 : index
    %c0_123 = arith.constant 0 : index
    %131 = vector.load %arg17[%c40_122, %c0_123] : memref<72x256xf32, #tpu.memory_space<vmem>>, vector<8x256xf32>
    tpu.vector_store %arg17[%c40_122, %c0_123], %130 {strides = array<i32>} : memref<72x256xf32, #tpu.memory_space<vmem>>, vector<8x256xf32>,
    %c0_124 = arith.constant 0 : index
    %c32_125 = arith.constant 32 : index
    %132 = vector.load %arg16[%c0_124, %c32_125] : memref<8x290xf32, #tpu.memory_space<vmem>>, vector<8x256xf32>
    %133 = vector.broadcast %4 : vector<1x256xf32> to vector<8x256xf32>
    %134 = arith.mulf %132, %133 : vector<8x256xf32>
    %c48_126 = arith.constant 48 : index
    %c0_127 = arith.constant 0 : index
    %135 = vector.load %arg17[%c48_126, %c0_127] : memref<72x256xf32, #tpu.memory_space<vmem>>, vector<8x256xf32>
    tpu.vector_store %arg17[%c48_126, %c0_127], %134 {strides = array<i32>} : memref<72x256xf32, #tpu.memory_space<vmem>>, vector<8x256xf32>,
    %c0_128 = arith.constant 0 : index
    %c33_129 = arith.constant 33 : index
    %136 = vector.load %arg16[%c0_128, %c33_129] : memref<8x290xf32, #tpu.memory_space<vmem>>, vector<8x256xf32>
    %c56_130 = arith.constant 56 : index
    %c0_131 = arith.constant 0 : index
    %137 = vector.load %arg17[%c56_130, %c0_131] : memref<72x256xf32, #tpu.memory_space<vmem>>, vector<8x256xf32>
    tpu.vector_store %arg17[%c56_130, %c0_131], %136 {strides = array<i32>} : memref<72x256xf32, #tpu.memory_space<vmem>>, vector<8x256xf32>,
    %c0_132 = arith.constant 0 : index
    %c34_133 = arith.constant 34 : index
    %138 = vector.load %arg16[%c0_132, %c34_133] : memref<8x290xf32, #tpu.memory_space<vmem>>, vector<8x256xf32>
    %139 = vector.broadcast %5 : vector<1x256xf32> to vector<8x256xf32>
    %140 = arith.mulf %138, %139 : vector<8x256xf32>
    %c64_134 = arith.constant 64 : index
    %c0_135 = arith.constant 0 : index
    %141 = vector.load %arg17[%c64_134, %c0_135] : memref<72x256xf32, #tpu.memory_space<vmem>>, vector<8x256xf32>
    tpu.vector_store %arg17[%c64_134, %c0_135], %140 {strides = array<i32>} : memref<72x256xf32, #tpu.memory_space<vmem>>, vector<8x256xf32>,
    %c0_136 = arith.constant 0 : index
    %c0_137 = arith.constant 0 : index
    %142 = vector.load %arg8[%c0_136, %c0_137] : memref<8x72xf32, #tpu.memory_space<vmem>>, vector<8x72xf32>
    %c0_138 = arith.constant 0 : index
    %c0_139 = arith.constant 0 : index
    %143 = vector.load %arg17[%c0_138, %c0_139] : memref<72x256xf32, #tpu.memory_space<vmem>>, vector<72x256xf32>
    %cst_140 = arith.constant dense<0.000000e+00> : vector<8x256xf32>
    %144 = tpu.matmul %142, %143, %cst_140 {dimension_numbers = #tpu.dot_dimension_numbers<[1], [0], [0], [1], [0, 0, 1, 1], [], []>} : vector<8x72xf32>, vector<72x256xf32>, vector<8x256xf32> -> vector<8x256xf32>
    %c0_141 = arith.constant 0 : index
    %c0_142 = arith.constant 0 : index
    %145 = vector.load %arg9[%c0_141, %c0_142] : memref<8x1xf32, #tpu.memory_space<vmem>>, vector<8x1xf32>
    %146 = vector.broadcast %145 : vector<8x1xf32> to vector<8x256xf32>
    %147 = arith.addf %144, %146 : vector<8x256xf32>
    %cst_143 = arith.constant 0.000000e+00 : f32
    %148 = vector.broadcast %cst_143 : f32 to vector<8x256xf32>
    %149 = arith.subf %148, %147 : vector<8x256xf32>
    %150 = math.exp %149 : vector<8x256xf32>
    %cst_144 = arith.constant 1.000000e+00 : f32
    %151 = vector.broadcast %cst_144 : f32 to vector<8x256xf32>
    %152 = arith.addf %151, %150 : vector<8x256xf32>
    %cst_145 = arith.constant 1.000000e+00 : f32
    %153 = vector.broadcast %cst_145 : f32 to vector<8x256xf32>
    %154 = arith.divf %153, %152 : vector<8x256xf32>
    %155 = arith.mulf %147, %154 : vector<8x256xf32>
    %c0_146 = arith.constant 0 : index
    %c17_147 = arith.constant 17 : index
    %156 = vector.load %arg16[%c0_146, %c17_147] : memref<8x290xf32, #tpu.memory_space<vmem>>, vector<8x256xf32>
    tpu.vector_store %arg16[%c0_146, %c17_147], %155 {strides = array<i32>} : memref<8x290xf32, #tpu.memory_space<vmem>>, vector<8x256xf32>,
    %c0_148 = arith.constant 0 : index
    %c0_149 = arith.constant 0 : index
    %157 = vector.load %arg16[%c0_148, %c0_149] : memref<8x290xf32, #tpu.memory_space<vmem>>, vector<8x256xf32>
    %158 = vector.broadcast %4 : vector<1x256xf32> to vector<8x256xf32>
    %159 = arith.mulf %157, %158 : vector<8x256xf32>
    %c0_150 = arith.constant 0 : index
    %c0_151 = arith.constant 0 : index
    %160 = vector.load %arg17[%c0_150, %c0_151] : memref<72x256xf32, #tpu.memory_space<vmem>>, vector<8x256xf32>
    tpu.vector_store %arg17[%c0_150, %c0_151], %159 {strides = array<i32>} : memref<72x256xf32, #tpu.memory_space<vmem>>, vector<8x256xf32>,
    %c0_152 = arith.constant 0 : index
    %c1_153 = arith.constant 1 : index
    %161 = vector.load %arg16[%c0_152, %c1_153] : memref<8x290xf32, #tpu.memory_space<vmem>>, vector<8x256xf32>
    %c8_154 = arith.constant 8 : index
    %c0_155 = arith.constant 0 : index
    %162 = vector.load %arg17[%c8_154, %c0_155] : memref<72x256xf32, #tpu.memory_space<vmem>>, vector<8x256xf32>
    tpu.vector_store %arg17[%c8_154, %c0_155], %161 {strides = array<i32>} : memref<72x256xf32, #tpu.memory_space<vmem>>, vector<8x256xf32>,
    %c0_156 = arith.constant 0 : index
    %c2_157 = arith.constant 2 : index
    %163 = vector.load %arg16[%c0_156, %c2_157] : memref<8x290xf32, #tpu.memory_space<vmem>>, vector<8x256xf32>
    %164 = vector.broadcast %5 : vector<1x256xf32> to vector<8x256xf32>
    %165 = arith.mulf %163, %164 : vector<8x256xf32>
    %c16_158 = arith.constant 16 : index
    %c0_159 = arith.constant 0 : index
    %166 = vector.load %arg17[%c16_158, %c0_159] : memref<72x256xf32, #tpu.memory_space<vmem>>, vector<8x256xf32>
    tpu.vector_store %arg17[%c16_158, %c0_159], %165 {strides = array<i32>} : memref<72x256xf32, #tpu.memory_space<vmem>>, vector<8x256xf32>,
    %c0_160 = arith.constant 0 : index
    %c16_161 = arith.constant 16 : index
    %167 = vector.load %arg16[%c0_160, %c16_161] : memref<8x290xf32, #tpu.memory_space<vmem>>, vector<8x256xf32>
    %168 = vector.broadcast %4 : vector<1x256xf32> to vector<8x256xf32>
    %169 = arith.mulf %167, %168 : vector<8x256xf32>
    %c24_162 = arith.constant 24 : index
    %c0_163 = arith.constant 0 : index
    %170 = vector.load %arg17[%c24_162, %c0_163] : memref<72x256xf32, #tpu.memory_space<vmem>>, vector<8x256xf32>
    tpu.vector_store %arg17[%c24_162, %c0_163], %169 {strides = array<i32>} : memref<72x256xf32, #tpu.memory_space<vmem>>, vector<8x256xf32>,
    %c0_164 = arith.constant 0 : index
    %c17_165 = arith.constant 17 : index
    %171 = vector.load %arg16[%c0_164, %c17_165] : memref<8x290xf32, #tpu.memory_space<vmem>>, vector<8x256xf32>
    %c32_166 = arith.constant 32 : index
    %c0_167 = arith.constant 0 : index
    %172 = vector.load %arg17[%c32_166, %c0_167] : memref<72x256xf32, #tpu.memory_space<vmem>>, vector<8x256xf32>
    tpu.vector_store %arg17[%c32_166, %c0_167], %171 {strides = array<i32>} : memref<72x256xf32, #tpu.memory_space<vmem>>, vector<8x256xf32>,
    %c0_168 = arith.constant 0 : index
    %c18_169 = arith.constant 18 : index
    %173 = vector.load %arg16[%c0_168, %c18_169] : memref<8x290xf32, #tpu.memory_space<vmem>>, vector<8x256xf32>
    %174 = vector.broadcast %5 : vector<1x256xf32> to vector<8x256xf32>
    %175 = arith.mulf %173, %174 : vector<8x256xf32>
    %c40_170 = arith.constant 40 : index
    %c0_171 = arith.constant 0 : index
    %176 = vector.load %arg17[%c40_170, %c0_171] : memref<72x256xf32, #tpu.memory_space<vmem>>, vector<8x256xf32>
    tpu.vector_store %arg17[%c40_170, %c0_171], %175 {strides = array<i32>} : memref<72x256xf32, #tpu.memory_space<vmem>>, vector<8x256xf32>,
    %c0_172 = arith.constant 0 : index
    %c32_173 = arith.constant 32 : index
    %177 = vector.load %arg16[%c0_172, %c32_173] : memref<8x290xf32, #tpu.memory_space<vmem>>, vector<8x256xf32>
    %178 = vector.broadcast %4 : vector<1x256xf32> to vector<8x256xf32>
    %179 = arith.mulf %177, %178 : vector<8x256xf32>
    %c48_174 = arith.constant 48 : index
    %c0_175 = arith.constant 0 : index
    %180 = vector.load %arg17[%c48_174, %c0_175] : memref<72x256xf32, #tpu.memory_space<vmem>>, vector<8x256xf32>
    tpu.vector_store %arg17[%c48_174, %c0_175], %179 {strides = array<i32>} : memref<72x256xf32, #tpu.memory_space<vmem>>, vector<8x256xf32>,
    %c0_176 = arith.constant 0 : index
    %c33_177 = arith.constant 33 : index
    %181 = vector.load %arg16[%c0_176, %c33_177] : memref<8x290xf32, #tpu.memory_space<vmem>>, vector<8x256xf32>
    %c56_178 = arith.constant 56 : index
    %c0_179 = arith.constant 0 : index
    %182 = vector.load %arg17[%c56_178, %c0_179] : memref<72x256xf32, #tpu.memory_space<vmem>>, vector<8x256xf32>
    tpu.vector_store %arg17[%c56_178, %c0_179], %181 {strides = array<i32>} : memref<72x256xf32, #tpu.memory_space<vmem>>, vector<8x256xf32>,
    %c0_180 = arith.constant 0 : index
    %c34_181 = arith.constant 34 : index
    %183 = vector.load %arg16[%c0_180, %c34_181] : memref<8x290xf32, #tpu.memory_space<vmem>>, vector<8x256xf32>
    %184 = vector.broadcast %5 : vector<1x256xf32> to vector<8x256xf32>
    %185 = arith.mulf %183, %184 : vector<8x256xf32>
    %c64_182 = arith.constant 64 : index
    %c0_183 = arith.constant 0 : index
    %186 = vector.load %arg17[%c64_182, %c0_183] : memref<72x256xf32, #tpu.memory_space<vmem>>, vector<8x256xf32>
    tpu.vector_store %arg17[%c64_182, %c0_183], %185 {strides = array<i32>} : memref<72x256xf32, #tpu.memory_space<vmem>>, vector<8x256xf32>,
    %c0_184 = arith.constant 0 : index
    %c0_185 = arith.constant 0 : index
    %187 = vector.load %arg10[%c0_184, %c0_185] : memref<8x72xf32, #tpu.memory_space<vmem>>, vector<8x72xf32>
    %c0_186 = arith.constant 0 : index
    %c0_187 = arith.constant 0 : index
    %188 = vector.load %arg17[%c0_186, %c0_187] : memref<72x256xf32, #tpu.memory_space<vmem>>, vector<72x256xf32>
    %cst_188 = arith.constant dense<0.000000e+00> : vector<8x256xf32>
    %189 = tpu.matmul %187, %188, %cst_188 {dimension_numbers = #tpu.dot_dimension_numbers<[1], [0], [0], [1], [0, 0, 1, 1], [], []>} : vector<8x72xf32>, vector<72x256xf32>, vector<8x256xf32> -> vector<8x256xf32>
    %c0_189 = arith.constant 0 : index
    %c0_190 = arith.constant 0 : index
    %190 = vector.load %arg11[%c0_189, %c0_190] : memref<8x1xf32, #tpu.memory_space<vmem>>, vector<8x1xf32>
    %191 = vector.broadcast %190 : vector<8x1xf32> to vector<8x256xf32>
    %192 = arith.addf %189, %191 : vector<8x256xf32>
    %cst_191 = arith.constant 0.000000e+00 : f32
    %193 = vector.broadcast %cst_191 : f32 to vector<8x256xf32>
    %194 = arith.subf %193, %192 : vector<8x256xf32>
    %195 = math.exp %194 : vector<8x256xf32>
    %cst_192 = arith.constant 1.000000e+00 : f32
    %196 = vector.broadcast %cst_192 : f32 to vector<8x256xf32>
    %197 = arith.addf %196, %195 : vector<8x256xf32>
    %cst_193 = arith.constant 1.000000e+00 : f32
    %198 = vector.broadcast %cst_193 : f32 to vector<8x256xf32>
    %199 = arith.divf %198, %197 : vector<8x256xf32>
    %200 = arith.mulf %192, %199 : vector<8x256xf32>
    %c0_194 = arith.constant 0 : index
    %c0_195 = arith.constant 0 : index
    %201 = vector.load %arg17[%c0_194, %c0_195] : memref<72x256xf32, #tpu.memory_space<vmem>>, vector<8x256xf32>
    tpu.vector_store %arg17[%c0_194, %c0_195], %200 {strides = array<i32>} : memref<72x256xf32, #tpu.memory_space<vmem>>, vector<8x256xf32>,
    %c8_196 = arith.constant 8 : index
    %c0_197 = arith.constant 0 : index
    %202 = vector.load %arg17[%c8_196, %c0_197] : memref<72x256xf32, #tpu.memory_space<vmem>>, vector<8x256xf32>
    tpu.vector_store %arg17[%c8_196, %c0_197], %110 {strides = array<i32>} : memref<72x256xf32, #tpu.memory_space<vmem>>, vector<8x256xf32>,
    %c16_198 = arith.constant 16 : index
    %c0_199 = arith.constant 0 : index
    %203 = vector.load %arg17[%c16_198, %c0_199] : memref<72x256xf32, #tpu.memory_space<vmem>>, vector<8x256xf32>
    tpu.vector_store %arg17[%c16_198, %c0_199], %20 {strides = array<i32>} : memref<72x256xf32, #tpu.memory_space<vmem>>, vector<8x256xf32>,
    %c24_200 = arith.constant 24 : index
    %c0_201 = arith.constant 0 : index
    %204 = vector.load %arg17[%c24_200, %c0_201] : memref<72x256xf32, #tpu.memory_space<vmem>>, vector<8x256xf32>
    tpu.vector_store %arg17[%c24_200, %c0_201], %19 {strides = array<i32>} : memref<72x256xf32, #tpu.memory_space<vmem>>, vector<8x256xf32>,
    %c0_202 = arith.constant 0 : index
    %c0_203 = arith.constant 0 : index
    %205 = vector.load %arg12[%c0_202, %c0_203] : memref<32x32xf32, #tpu.memory_space<vmem>>, vector<32x32xf32>
    %c0_204 = arith.constant 0 : index
    %c0_205 = arith.constant 0 : index
    %206 = vector.load %arg17[%c0_204, %c0_205] : memref<72x256xf32, #tpu.memory_space<vmem>>, vector<32x256xf32>
    %cst_206 = arith.constant dense<0.000000e+00> : vector<32x256xf32>
    %207 = tpu.matmul %205, %206, %cst_206 {dimension_numbers = #tpu.dot_dimension_numbers<[1], [0], [0], [1], [0, 0, 1, 1], [], []>} : vector<32x32xf32>, vector<32x256xf32>, vector<32x256xf32> -> vector<32x256xf32>
    %c0_207 = arith.constant 0 : index
    %c0_208 = arith.constant 0 : index
    %208 = vector.load %arg13[%c0_207, %c0_208] : memref<32x1xf32, #tpu.memory_space<vmem>>, vector<32x1xf32>
    %209 = vector.broadcast %208 : vector<32x1xf32> to vector<32x256xf32>
    %210 = arith.addf %207, %209 : vector<32x256xf32>
    %cst_209 = arith.constant 0.000000e+00 : f32
    %211 = vector.broadcast %cst_209 : f32 to vector<32x256xf32>
    %212 = arith.subf %211, %210 : vector<32x256xf32>
    %213 = math.exp %212 : vector<32x256xf32>
    %cst_210 = arith.constant 1.000000e+00 : f32
    %214 = vector.broadcast %cst_210 : f32 to vector<32x256xf32>
    %215 = arith.addf %214, %213 : vector<32x256xf32>
    %cst_211 = arith.constant 1.000000e+00 : f32
    %216 = vector.broadcast %cst_211 : f32 to vector<32x256xf32>
    %217 = arith.divf %216, %215 : vector<32x256xf32>
    %218 = arith.mulf %210, %217 : vector<32x256xf32>
    %c0_212 = arith.constant 0 : index
    %c0_213 = arith.constant 0 : index
    %c0_214 = arith.constant 0 : index
    %219 = vector.load %arg15[%c0_212, %c0_213, %c0_214] : memref<1x32x256xf32, #tpu.memory_space<vmem>>, vector<1x32x256xf32>
    %220 = vector.shape_cast %219 : vector<1x32x256xf32> to vector<32x256xf32>
    %221 = vector.shape_cast %218 : vector<32x256xf32> to vector<1x32x256xf32>
    tpu.vector_store %arg15[%c0_212, %c0_213, %c0_214], %221 {strides = array<i32>} : memref<1x32x256xf32, #tpu.memory_space<vmem>>, vector<1x32x256xf32>,
    return
  }
  func.func @transform_0(%arg0: i32) -> (i32, i32, i32) {
    %c0_i32 = arith.constant 0 : i32
    %c0_i32_0 = arith.constant 0 : i32
    %c0_i32_1 = arith.constant 0 : i32
    return %arg0, %c0_i32, %c0_i32_0 : i32, i32, i32
  }
  func.func @transform_1(%arg0: i32) -> (i32, i32) {
    %c0_i32 = arith.constant 0 : i32
    %c0_i32_0 = arith.constant 0 : i32
    %c0_i32_1 = arith.constant 0 : i32
    return %c0_i32, %c0_i32_0 : i32, i32
  }
  func.func @transform_2(%arg0: i32) -> (i32, i32) {
    %c0_i32 = arith.constant 0 : i32
    %c0_i32_0 = arith.constant 0 : i32
    %c0_i32_1 = arith.constant 0 : i32
    return %c0_i32, %c0_i32_0 : i32, i32
  }
  func.func @transform_3(%arg0: i32) -> (i32, i32) {
    %c0_i32 = arith.constant 0 : i32
    %c0_i32_0 = arith.constant 0 : i32
    %c0_i32_1 = arith.constant 0 : i32
    return %c0_i32, %c0_i32_0 : i32, i32
  }
  func.func @transform_4(%arg0: i32) -> (i32, i32) {
    %c0_i32 = arith.constant 0 : i32
    %c0_i32_0 = arith.constant 0 : i32
    %c0_i32_1 = arith.constant 0 : i32
    return %c0_i32, %c0_i32_0 : i32, i32
  }
  func.func @transform_5(%arg0: i32) -> (i32, i32) {
    %c0_i32 = arith.constant 0 : i32
    %c0_i32_0 = arith.constant 0 : i32
    %c0_i32_1 = arith.constant 0 : i32
    return %c0_i32, %c0_i32_0 : i32, i32
  }
  func.func @transform_6(%arg0: i32) -> (i32, i32) {
    %c0_i32 = arith.constant 0 : i32
    %c0_i32_0 = arith.constant 0 : i32
    %c0_i32_1 = arith.constant 0 : i32
    return %c0_i32, %c0_i32_0 : i32, i32
  }
  func.func @transform_7(%arg0: i32) -> (i32, i32) {
    %c0_i32 = arith.constant 0 : i32
    %c0_i32_0 = arith.constant 0 : i32
    %c0_i32_1 = arith.constant 0 : i32
    return %c0_i32, %c0_i32_0 : i32, i32
  }
  func.func @transform_8(%arg0: i32) -> (i32, i32) {
    %c0_i32 = arith.constant 0 : i32
    %c0_i32_0 = arith.constant 0 : i32
    %c0_i32_1 = arith.constant 0 : i32
    return %c0_i32, %c0_i32_0 : i32, i32
  }
  func.func @transform_9(%arg0: i32) -> (i32, i32) {
    %c0_i32 = arith.constant 0 : i32
    %c0_i32_0 = arith.constant 0 : i32
    %c0_i32_1 = arith.constant 0 : i32
    return %c0_i32, %c0_i32_0 : i32, i32
  }
  func.func @transform_10(%arg0: i32) -> (i32, i32) {
    %c0_i32 = arith.constant 0 : i32
    %c0_i32_0 = arith.constant 0 : i32
    %c0_i32_1 = arith.constant 0 : i32
    return %c0_i32, %c0_i32_0 : i32, i32
  }
  func.func @transform_11(%arg0: i32) -> (i32, i32) {
    %c0_i32 = arith.constant 0 : i32
    %c0_i32_0 = arith.constant 0 : i32
    %c0_i32_1 = arith.constant 0 : i32
    return %c0_i32, %c0_i32_0 : i32, i32
  }
  func.func @transform_12(%arg0: i32) -> (i32, i32) {
    %c0_i32 = arith.constant 0 : i32
    %c0_i32_0 = arith.constant 0 : i32
    %c0_i32_1 = arith.constant 0 : i32
    return %c0_i32, %c0_i32_0 : i32, i32
  }
  func.func @transform_13(%arg0: i32) -> (i32, i32) {
    %c0_i32 = arith.constant 0 : i32
    %c0_i32_0 = arith.constant 0 : i32
    %c0_i32_1 = arith.constant 0 : i32
    return %c0_i32, %c0_i32_0 : i32, i32
  }
  func.func @transform_14(%arg0: i32) -> (i32, i32, i32) {
    %c0_i32 = arith.constant 0 : i32
    %c0_i32_0 = arith.constant 0 : i32
    %c0_i32_1 = arith.constant 0 : i32
    return %arg0, %c0_i32, %c0_i32_0 : i32, i32, i32
  }
}

</mosaic_0001>

<llo_original>
// kernel: _elan_apply.1
$region0: #{_elan_apply.1}
  #allocation0 [shape = 'u32[]', space=smem, size = 0x4, offset = 0x4, fixed_abs, tag = 'smem constant byte address 0x4 - core index']
  #allocation1 [shape = 'u32[72,128]{1,0:T(1,128)}', space=vmem, size = 0x9000, scoped, tag = 'internal scratch']
  #allocation2 [shape = 'f32[8,290]{1,0:T(8,128)}', space=vmem, size = 0x3000, scoped, tag = 'scratch operand']
  #allocation3 [shape = 'f32[72,256]{1,0:T(8,128)}', space=vmem, size = 0x12000, scoped, tag = 'scratch operand']
  %s0 = inlined_call_operand.vmem [shape: f32[2,16,256], index: 0, kind: input, shape index: {}]
  %s1 = inlined_call_operand.vmem [shape: f32[16,16], index: 1, kind: input, shape index: {}]
  %s2 = inlined_call_operand.vmem [shape: f32[16,1], index: 2, kind: input, shape index: {}]
  %s3 = inlined_call_operand.vmem [shape: f32[8,72], index: 3, kind: input, shape index: {}]
  %s4 = inlined_call_operand.vmem [shape: f32[8,1], index: 4, kind: input, shape index: {}]
  %s5 = inlined_call_operand.vmem [shape: f32[8,72], index: 5, kind: input, shape index: {}]
  %s6 = inlined_call_operand.vmem [shape: f32[8,1], index: 6, kind: input, shape index: {}]
  %s7 = inlined_call_operand.vmem [shape: f32[8,72], index: 7, kind: input, shape index: {}]
  %s8 = inlined_call_operand.vmem [shape: f32[8,1], index: 8, kind: input, shape index: {}]
  %s9 = inlined_call_operand.vmem [shape: f32[8,72], index: 9, kind: input, shape index: {}]
  %s10 = inlined_call_operand.vmem [shape: f32[8,1], index: 10, kind: input, shape index: {}]
  %s11 = inlined_call_operand.vmem [shape: f32[32,32], index: 11, kind: input, shape index: {}]
  %s12 = inlined_call_operand.vmem [shape: f32[32,1], index: 12, kind: input, shape index: {}]
  %s13 = inlined_call_operand.vmem [shape: f32[2,256], index: 13, kind: input, shape index: {}]
  %s14 = inlined_call_operand.vmem [shape: f32[2,32,256], index: 14, kind: output, shape index: {}]
  %s15 = sld [smem:[#allocation0]]
  $region89: #{_elan_apply.1} parent=0
    _
  %s17 = ssub.s32 1, %s15
  %s18 = scalar_select 0, %s17, %s15
  loop: start=0, step=1, limit=4
  $region2: #{_elan_apply.1} parent=0 // loop_pre_header
    _
  $region3: #{_elan_apply.1} parent=0 // loop_header
    %s20 = sphi 0, %s24
    %p21 = scmp.ge.s32.totalorder %s20, 4
    %s30 = sphi 0, %s32
    %s33 = sphi 0, %s30
    %s34 = sphi 0, %s33
    %s50 = sphi 0, %s34
    %s54 = sphi 0, %s54
    %s56 = sphi 0, %s54
    %s57 = sphi 0, %s56
    %s71 = sphi 0, %s57
    %s75 = sphi 0, %s75
    %s77 = sphi 0, %s75
    %s78 = sphi 0, %s77
    %s92 = sphi 0, %s78
    %s96 = sphi 0, %s96
    %s98 = sphi 0, %s96
    %s99 = sphi 0, %s98
    %s113 = sphi 0, %s99
    %s117 = sphi 0, %s117
    %s119 = sphi 0, %s117
    %s120 = sphi 0, %s119
    %s134 = sphi 0, %s120
    %s138 = sphi 0, %s138
    %s140 = sphi 0, %s138
    %s141 = sphi 0, %s140
    %s155 = sphi 0, %s141
    %s159 = sphi 0, %s159
    %s161 = sphi 0, %s159
    %s162 = sphi 0, %s161
    %s176 = sphi 0, %s162
    %s180 = sphi 0, %s180
    %s182 = sphi 0, %s180
    %s183 = sphi 0, %s182
    %s197 = sphi 0, %s183
    %s201 = sphi 0, %s201
    %s203 = sphi 0, %s201
    %s204 = sphi 0, %s203
    %s218 = sphi 0, %s204
    %s222 = sphi 0, %s222
    %s224 = sphi 0, %s222
    %s225 = sphi 0, %s224
    %s239 = sphi 0, %s225
    %s243 = sphi 0, %s243
    %s245 = sphi 0, %s243
    %s246 = sphi 0, %s245
    %s260 = sphi 0, %s246
    %s264 = sphi 0, %s264
    %s266 = sphi 0, %s264
    %s267 = sphi 0, %s266
    %s281 = sphi 0, %s267
    %s285 = sphi 0, %s285
    %s287 = sphi 0, %s285
    %s288 = sphi 0, %s287
    %s302 = sphi 0, %s288
    %s306 = sphi 0, %s306
    %s308 = sphi 0, %s306
    %s309 = sphi 0, %s308
    %s323 = sphi 0, %s309
    %s329 = sphi 0, %s331
    %s332 = sphi 0, %s329
    %s333 = sphi 0, %s332
    %s349 = sphi 0, %s333
  $region4: #{_elan_apply.1} parent=0 // loop_header_branch
    %23 = sbr.rel (%p21) target = $region8
  $region5: #{_elan_apply.1} parent=0 // loop_body
    %s25 = ssub.s32 %s20, 1
    %s26 = ssub.s32 %s20, 2
    %s27 = sadd.s32 %s20, 1
    %s28 = ssub.s32 %s20, %s27
    %p29 = scmp.eq.s32.totalorder %s28, 0
    %s31 = sadd.s32 %s30, 1
    %s32 = scalar_select %p29, %s30, %s31
    %p35 = pneg %p29
    %p36 = scmp.eq.s32.totalorder %s20, 1
    %p37 = por %p35, %p36
    %p38 = scmp.ne.s32.totalorder %s30, %s33
    %p39 = scmp.eq.s32.totalorder %s20, 0
    %p40 = por %p38, %p39
    %p41 = scmp.ne.s32.totalorder %s30, %s33
    %p42 = scmp.eq.s32.totalorder %s25, 1
    %p43 = por %p41, %p42
    %p44 = scmp.ne.s32.totalorder %s33, %s34
    %p45 = scmp.eq.s32.totalorder %s25, 0
    %p46 = por %p44, %p45
    %p47 = scmp.ne.s32.totalorder %s33, %s34
    %p48 = scmp.eq.s32.totalorder %s26, 1
    %p49 = por %p47, %p48
    %p51 = scmp.ne.s32.totalorder %s34, %s50
    %p52 = scmp.eq.s32.totalorder %s26, 0
    %p53 = por %p51, %p52
    %s55 = sadd.s32 %s54, 1
    %p58 = scmp.eq.s32.totalorder %s20, 1
    %p59 = scmp.ne.s32.totalorder %s54, %s56
    %p60 = scmp.eq.s32.totalorder %s20, 0
    %p61 = por %p59, %p60
    %p62 = scmp.ne.s32.totalorder %s54, %s56
    %p63 = scmp.eq.s32.totalorder %s25, 1
    %p64 = por %p62, %p63
    %p65 = scmp.ne.s32.totalorder %s56, %s57
    %p66 = scmp.eq.s32.totalorder %s25, 0
    %p67 = por %p65, %p66
    %p68 = scmp.ne.s32.totalorder %s56, %s57
    %p69 = scmp.eq.s32.totalorder %s26, 1
    %p70 = por %p68, %p69
    %p72 = scmp.ne.s32.totalorder %s57, %s71
    %p73 = scmp.eq.s32.totalorder %s26, 0
    %p74 = por %p72, %p73
    %s76 = sadd.s32 %s75, 1
    %p79 = scmp.eq.s32.totalorder %s20, 1
    %p80 = scmp.ne.s32.totalorder %s75, %s77
    %p81 = scmp.eq.s32.totalorder %s20, 0
    %p82 = por %p80, %p81
    %p83 = scmp.ne.s32.totalorder %s75, %s77
    %p84 = scmp.eq.s32.totalorder %s25, 1
    %p85 = por %p83, %p84
    %p86 = scmp.ne.s32.totalorder %s77, %s78
    %p87 = scmp.eq.s32.totalorder %s25, 0
    %p88 = por %p86, %p87
    %p89 = scmp.ne.s32.totalorder %s77, %s78
    %p90 = scmp.eq.s32.totalorder %s26, 1
    %p91 = por %p89, %p90
    %p93 = scmp.ne.s32.totalorder %s78, %s92
    %p94 = scmp.eq.s32.totalorder %s26, 0
    %p95 = por %p93, %p94
    %s97 = sadd.s32 %s96, 1
    %p100 = scmp.eq.s32.totalorder %s20, 1
    %p101 = scmp.ne.s32.totalorder %s96, %s98
    %p102 = scmp.eq.s32.totalorder %s20, 0
    %p103 = por %p101, %p102
    %p104 = scmp.ne.s32.totalorder %s96, %s98
    %p105 = scmp.eq.s32.totalorder %s25, 1
    %p106 = por %p104, %p105
    %p107 = scmp.ne.s32.totalorder %s98, %s99
    %p108 = scmp.eq.s32.totalorder %s25, 0
    %p109 = por %p107, %p108
    %p110 = scmp.ne.s32.totalorder %s98, %s99
    %p111 = scmp.eq.s32.totalorder %s26, 1
    %p112 = por %p110, %p111
    %p114 = scmp.ne.s32.totalorder %s99, %s113
    %p115 = scmp.eq.s32.totalorder %s26, 0
    %p116 = por %p114, %p115
    %s118 = sadd.s32 %s117, 1
    %p121 = scmp.eq.s32.totalorder %s20, 1
    %p122 = scmp.ne.s32.totalorder %s117, %s119
    %p123 = scmp.eq.s32.totalorder %s20, 0
    %p124 = por %p122, %p123
    %p125 = scmp.ne.s32.totalorder %s117, %s119
    %p126 = scmp.eq.s32.totalorder %s25, 1
    %p127 = por %p125, %p126
    %p128 = scmp.ne.s32.totalorder %s119, %s120
    %p129 = scmp.eq.s32.totalorder %s25, 0
    %p130 = por %p128, %p129
    %p131 = scmp.ne.s32.totalorder %s119, %s120
    %p132 = scmp.eq.s32.totalorder %s26, 1
    %p133 = por %p131, %p132
    %p135 = scmp.ne.s32.totalorder %s120, %s134
    %p136 = scmp.eq.s32.totalorder %s26, 0
    %p137 = por %p135, %p136
    %s139 = sadd.s32 %s138, 1
    %p142 = scmp.eq.s32.totalorder %s20, 1
    %p143 = scmp.ne.s32.totalorder %s138, %s140
    %p144 = scmp.eq.s32.totalorder %s20, 0
    %p145 = por %p143, %p144
    %p146 = scmp.ne.s32.totalorder %s138, %s140
    %p147 = scmp.eq.s32.totalorder %s25, 1
    %p148 = por %p146, %p147
    %p149 = scmp.ne.s32.totalorder %s140, %s141
    %p150 = scmp.eq.s32.totalorder %s25, 0
    %p151 = por %p149, %p150
    %p152 = scmp.ne.s32.totalorder %s140, %s141
    %p153 = scmp.eq.s32.totalorder %s26, 1
    %p154 = por %p152, %p153
    %p156 = scmp.ne.s32.totalorder %s141, %s155
    %p157 = scmp.eq.s32.totalorder %s26, 0
    %p158 = por %p156, %p157
    %s160 = sadd.s32 %s159, 1
    %p163 = scmp.eq.s32.totalorder %s20, 1
    %p164 = scmp.ne.s32.totalorder %s159, %s161
    %p165 = scmp.eq.s32.totalorder %s20, 0
    %p166 = por %p164, %p165
    %p167 = scmp.ne.s32.totalorder %s159, %s161
    %p168 = scmp.eq.s32.totalorder %s25, 1
    %p169 = por %p167, %p168
    %p170 = scmp.ne.s32.totalorder %s161, %s162
    %p171 = scmp.eq.s32.totalorder %s25, 0
    %p172 = por %p170, %p171
    %p173 = scmp.ne.s32.totalorder %s161, %s162
    %p174 = scmp.eq.s32.totalorder %s26, 1
    %p175 = por %p173, %p174
    %p177 = scmp.ne.s32.totalorder %s162, %s176
    %p178 = scmp.eq.s32.totalorder %s26, 0
    %p179 = por %p177, %p178
    %s181 = sadd.s32 %s180, 1
    %p184 = scmp.eq.s32.totalorder %s20, 1
    %p185 = scmp.ne.s32.totalorder %s180, %s182
    %p186 = scmp.eq.s32.totalorder %s20, 0
    %p187 = por %p185, %p186
    %p188 = scmp.ne.s32.totalorder %s180, %s182
    %p189 = scmp.eq.s32.totalorder %s25, 1
    %p190 = por %p188, %p189
    %p191 = scmp.ne.s32.totalorder %s182, %s183
    %p192 = scmp.eq.s32.totalorder %s25, 0
    %p193 = por %p191, %p192
    %p194 = scmp.ne.s32.totalorder %s182, %s183
    %p195 = scmp.eq.s32.totalorder %s26, 1
    %p196 = por %p194, %p195
    %p198 = scmp.ne.s32.totalorder %s183, %s197
    %p199 = scmp.eq.s32.totalorder %s26, 0
    %p200 = por %p198, %p199
    %s202 = sadd.s32 %s201, 1
    %p205 = scmp.eq.s32.totalorder %s20, 1
    %p206 = scmp.ne.s32.totalorder %s201, %s203
    %p207 = scmp.eq.s32.totalorder %s20, 0
    %p208 = por %p206, %p207
    %p209 = scmp.ne.s32.totalorder %s201, %s203
    %p210 = scmp.eq.s32.totalorder %s25, 1
    %p211 = por %p209, %p210
    %p212 = scmp.ne.s32.totalorder %s203, %s204
    %p213 = scmp.eq.s32.totalorder %s25, 0
    %p214 = por %p212, %p213
    %p215 = scmp.ne.s32.totalorder %s203, %s204
    %p216 = scmp.eq.s32.totalorder %s26, 1
    %p217 = por %p215, %p216
    %p219 = scmp.ne.s32.totalorder %s204, %s218
    %p220 = scmp.eq.s32.totalorder %s26, 0
    %p221 = por %p219, %p220
    %s223 = sadd.s32 %s222, 1
    %p226 = scmp.eq.s32.totalorder %s20, 1
    %p227 = scmp.ne.s32.totalorder %s222, %s224
    %p228 = scmp.eq.s32.totalorder %s20, 0
    %p229 = por %p227, %p228
    %p230 = scmp.ne.s32.totalorder %s222, %s224
    %p231 = scmp.eq.s32.totalorder %s25, 1
    %p232 = por %p230, %p231
    %p233 = scmp.ne.s32.totalorder %s224, %s225
    %p234 = scmp.eq.s32.totalorder %s25, 0
    %p235 = por %p233, %p234
    %p236 = scmp.ne.s32.totalorder %s224, %s225
    %p237 = scmp.eq.s32.totalorder %s26, 1
    %p238 = por %p236, %p237
    %p240 = scmp.ne.s32.totalorder %s225, %s239
    %p241 = scmp.eq.s32.totalorder %s26, 0
    %p242 = por %p240, %p241
    %s244 = sadd.s32 %s243, 1
    %p247 = scmp.eq.s32.totalorder %s20, 1
    %p248 = scmp.ne.s32.totalorder %s243, %s245
    %p249 = scmp.eq.s32.totalorder %s20, 0
    %p250 = por %p248, %p249
    %p251 = scmp.ne.s32.totalorder %s243, %s245
    %p252 = scmp.eq.s32.totalorder %s25, 1
    %p253 = por %p251, %p252
    %p254 = scmp.ne.s32.totalorder %s245, %s246
    %p255 = scmp.eq.s32.totalorder %s25, 0
    %p256 = por %p254, %p255
    %p257 = scmp.ne.s32.totalorder %s245, %s246
    %p258 = scmp.eq.s32.totalorder %s26, 1
    %p259 = por %p257, %p258
    %p261 = scmp.ne.s32.totalorder %s246, %s260
    %p262 = scmp.eq.s32.totalorder %s26, 0
    %p263 = por %p261, %p262
    %s265 = sadd.s32 %s264, 1
    %p268 = scmp.eq.s32.totalorder %s20, 1
    %p269 = scmp.ne.s32.totalorder %s264, %s266
    %p270 = scmp.eq.s32.totalorder %s20, 0
    %p271 = por %p269, %p270
    %p272 = scmp.ne.s32.totalorder %s264, %s266
    %p273 = scmp.eq.s32.totalorder %s25, 1
    %p274 = por %p272, %p273
    %p275 = scmp.ne.s32.totalorder %s266, %s267
    %p276 = scmp.eq.s32.totalorder %s25, 0
    %p277 = por %p275, %p276
    %p278 = scmp.ne.s32.totalorder %s266, %s267
    %p279 = scmp.eq.s32.totalorder %s26, 1
    %p280 = por %p278, %p279
    %p282 = scmp.ne.s32.totalorder %s267, %s281
    %p283 = scmp.eq.s32.totalorder %s26, 0
    %p284 = por %p282, %p283
    %s286 = sadd.s32 %s285, 1
    %p289 = scmp.eq.s32.totalorder %s20, 1
    %p290 = scmp.ne.s32.totalorder %s285, %s287
    %p291 = scmp.eq.s32.totalorder %s20, 0
    %p292 = por %p290, %p291
    %p293 = scmp.ne.s32.totalorder %s285, %s287
    %p294 = scmp.eq.s32.totalorder %s25, 1
    %p295 = por %p293, %p294
    %p296 = scmp.ne.s32.totalorder %s287, %s288
    %p297 = scmp.eq.s32.totalorder %s25, 0
    %p298 = por %p296, %p297
    %p299 = scmp.ne.s32.totalorder %s287, %s288
    %p300 = scmp.eq.s32.totalorder %s26, 1
    %p301 = por %p299, %p300
    %p303 = scmp.ne.s32.totalorder %s288, %s302
    %p304 = scmp.eq.s32.totalorder %s26, 0
    %p305 = por %p303, %p304
    %s307 = sadd.s32 %s306, 1
    %p310 = scmp.eq.s32.totalorder %s20, 1
    %p311 = scmp.ne.s32.totalorder %s306, %s308
    %p312 = scmp.eq.s32.totalorder %s20, 0
    %p313 = por %p311, %p312
    %p314 = scmp.ne.s32.totalorder %s306, %s308
    %p315 = scmp.eq.s32.totalorder %s25, 1
    %p316 = por %p314, %p315
    %p317 = scmp.ne.s32.totalorder %s308, %s309
    %p318 = scmp.eq.s32.totalorder %s25, 0
    %p319 = por %p317, %p318
    %p320 = scmp.ne.s32.totalorder %s308, %s309
    %p321 = scmp.eq.s32.totalorder %s26, 1
    %p322 = por %p320, %p321
    %p324 = scmp.ne.s32.totalorder %s309, %s323
    %p325 = scmp.eq.s32.totalorder %s26, 0
    %p326 = por %p324, %p325
    %s327 = ssub.s32 %s20, %s27
    %p328 = scmp.eq.s32.totalorder %s327, 0
    %s330 = sadd.s32 %s329, 1
    %s331 = scalar_select %p328, %s329, %s330
    %p334 = pneg %p328
    %p335 = scmp.eq.s32.totalorder %s20, 1
    %p336 = por %p334, %p335
    %p337 = scmp.ne.s32.totalorder %s329, %s332
    %p338 = scmp.eq.s32.totalorder %s20, 0
    %p339 = por %p337, %p338
    %p340 = scmp.ne.s32.totalorder %s329, %s332
    %p341 = scmp.eq.s32.totalorder %s25, 1
    %p342 = por %p340, %p341
    %p343 = scmp.ne.s32.totalorder %s332, %s333
    %p344 = scmp.eq.s32.totalorder %s25, 0
    %p345 = por %p343, %p344
    %p346 = scmp.ne.s32.totalorder %s332, %s333
    %p347 = scmp.eq.s32.totalorder %s26, 1
    %p348 = por %p346, %p347
    %p350 = scmp.ne.s32.totalorder %s333, %s349
    %p351 = scmp.eq.s32.totalorder %s26, 0
    %p352 = por %p350, %p351
    %p353 = scmp.le.s32.totalorder 1, %s20
    %p354 = scmp.lt.s32.totalorder %s20, 3
    %p355 = pnand %p353, %p354
    %p356 = pneg %p355
    // Predicated region
    $region9: #{_elan_apply.1} parent=5 // pred_check
      _
    $region10: #{_elan_apply.1} parent=5 // pred_check_branch
      %358 = sbr.rel (%p355) target = $region12
    $region11: #{_elan_apply.1} parent=5 // pred_region
      %s359 = ssub.s32 %s20, 1
      // Predicated region
      $region13: #{_elan_apply.1} parent=11 // pred_check
        %p360 = pneg %p67
      $region14: #{_elan_apply.1} parent=11 // pred_check_branch
        %362 = sbr.rel (%p360) target = $region16
      $region15: #{_elan_apply.1} parent=11 // pred_region
        _
      $region16: #{_elan_apply.1} parent=11 // pred_fallthru
        _
      // Predicated region
      $region17: #{_elan_apply.1} parent=11 // pred_check
        %p363 = pneg %p88
      $region18: #{_elan_apply.1} parent=11 // pred_check_branch
        %365 = sbr.rel (%p363) target = $region20
      $region19: #{_elan_apply.1} parent=11 // pred_region
        _
      $region20: #{_elan_apply.1} parent=11 // pred_fallthru
        _
      // Predicated region
      $region21: #{_elan_apply.1} parent=11 // pred_check
        %p366 = pneg %p109
      $region22: #{_elan_apply.1} parent=11 // pred_check_branch
        %368 = sbr.rel (%p366) target = $region24
      $region23: #{_elan_apply.1} parent=11 // pred_region
        _
      $region24: #{_elan_apply.1} parent=11 // pred_fallthru
        _
      // Predicated region
      $region25: #{_elan_apply.1} parent=11 // pred_check
        %p369 = pneg %p130
      $region26: #{_elan_apply.1} parent=11 // pred_check_branch
        %371 = sbr.rel (%p369) target = $region28
      $region27: #{_elan_apply.1} parent=11 // pred_region
        _
      $region28: #{_elan_apply.1} parent=11 // pred_fallthru
        _
      // Predicated region
      $region29: #{_elan_apply.1} parent=11 // pred_check
        %p372 = pneg %p151
      $region30: #{_elan_apply.1} parent=11 // pred_check_branch
        %374 = sbr.rel (%p372) target = $region32
      $region31: #{_elan_apply.1} parent=11 // pred_region
        _
      $region32: #{_elan_apply.1} parent=11 // pred_fallthru
        _
      // Predicated region
      $region33: #{_elan_apply.1} parent=11 // pred_check
        %p375 = pneg %p172
      $region34: #{_elan_apply.1} parent=11 // pred_check_branch
        %377 = sbr.rel (%p375) target = $region36
      $region35: #{_elan_apply.1} parent=11 // pred_region
        _
      $region36: #{_elan_apply.1} parent=11 // pred_fallthru
        _
      // Predicated region
      $region37: #{_elan_apply.1} parent=11 // pred_check
        %p378 = pneg %p193
      $region38: #{_elan_apply.1} parent=11 // pred_check_branch
        %380 = sbr.rel (%p378) target = $region40
      $region39: #{_elan_apply.1} parent=11 // pred_region
        _
      $region40: #{_elan_apply.1} parent=11 // pred_fallthru
        _
      // Predicated region
      $region41: #{_elan_apply.1} parent=11 // pred_check
        %p381 = pneg %p214
      $region42: #{_elan_apply.1} parent=11 // pred_check_branch
        %383 = sbr.rel (%p381) target = $region44
      $region43: #{_elan_apply.1} parent=11 // pred_region
        _
      $region44: #{_elan_apply.1} parent=11 // pred_fallthru
        _
      // Predicated region
      $region45: #{_elan_apply.1} parent=11 // pred_check
        %p384 = pneg %p235
      $region46: #{_elan_apply.1} parent=11 // pred_check_branch
        %386 = sbr.rel (%p384) target = $region48
      $region47: #{_elan_apply.1} parent=11 // pred_region
        _
      $region48: #{_elan_apply.1} parent=11 // pred_fallthru
        _
      // Predicated region
      $region49: #{_elan_apply.1} parent=11 // pred_check
        %p387 = pneg %p256
      $region50: #{_elan_apply.1} parent=11 // pred_check_branch
        %389 = sbr.rel (%p387) target = $region52
      $region51: #{_elan_apply.1} parent=11 // pred_region
        _
      $region52: #{_elan_apply.1} parent=11 // pred_fallthru
        _
      // Predicated region
      $region53: #{_elan_apply.1} parent=11 // pred_check
        %p390 = pneg %p277
      $region54: #{_elan_apply.1} parent=11 // pred_check_branch
        %392 = sbr.rel (%p390) target = $region56
      $region55: #{_elan_apply.1} parent=11 // pred_region
        _
      $region56: #{_elan_apply.1} parent=11 // pred_fallthru
        _
      // Predicated region
      $region57: #{_elan_apply.1} parent=11 // pred_check
        %p393 = pneg %p298
      $region58: #{_elan_apply.1} parent=11 // pred_check_branch
        %395 = sbr.rel (%p393) target = $region60
      $region59: #{_elan_apply.1} parent=11 // pred_region
        _
      $region60: #{_elan_apply.1} parent=11 // pred_fallthru
        _
      // Predicated region
      $region61: #{_elan_apply.1} parent=11 // pred_check
        %p396 = pneg %p319
      $region62: #{_elan_apply.1} parent=11 // pred_check_branch
        %398 = sbr.rel (%p396) target = $region64
      $region63: #{_elan_apply.1} parent=11 // pred_region
        _
      $region64: #{_elan_apply.1} parent=11 // pred_fallthru
        _
    $region12: #{_elan_apply.1} parent=5 // pred_fallthru
      _
    %p399 = scmp.lt.s32.totalorder %s20, 2
    // Predicated region
    $region65: #{_elan_apply.1} parent=5 // pred_check
      %p400 = pneg %p399
    $region66: #{_elan_apply.1} parent=5 // pred_check_branch
      %402 = sbr.rel (%p400) target = $region68
    $region67: #{_elan_apply.1} parent=5 // pred_region
      // Predicated region
      $region69: #{_elan_apply.1} parent=67 // pred_check
        %p403 = pneg %p40
      $region70: #{_elan_apply.1} parent=67 // pred_check_branch
        %405 = sbr.rel (%p403) target = $region72
      $region71: #{_elan_apply.1} parent=67 // pred_region
        %p406 = scmp.lt.s32.totalorder %s20, 1
        %s407 = scalar_select %p406, %s20, 1
        %s408 = smul.addr %s407, 4
        %s409 = smul.addr %s408, 8
        %s410 = scalar_lea.vmem %s0, %s409
      $region72: #{_elan_apply.1} parent=67 // pred_fallthru
        _
    $region68: #{_elan_apply.1} parent=5 // pred_fallthru
      _
    %p411 = scmp.le.s32.totalorder 1, %s20
    %p412 = scmp.lt.s32.totalorder %s20, 3
    %p413 = pnand %p411, %p412
    %p414 = pneg %p413
    // Predicated region
    $region73: #{_elan_apply.1} parent=5 // pred_check
      _
    $region74: #{_elan_apply.1} parent=5 // pred_check_branch
      %416 = sbr.rel (%p413) target = $region76
    $region75: #{_elan_apply.1} parent=5 // pred_region
      %s417 = ssub.s32 %s20, 1
      %p418 = scmp.lt.s32.totalorder %s25, 1
      %s419 = scalar_select %p418, %s25, 1
      %s420 = smul.addr %s419, 4
      %s421 = smul.addr %s420, 8
      %s422 = scalar_lea.vmem %s0, %s421
      %p423 = pneg %p46
      %p424 = pneg %p43
      %p425 = pneg %p67
      %p426 = pneg %p64
      %p427 = pneg %p88
      %p428 = pneg %p85
      %p429 = pneg %p109
      %p430 = pneg %p106
      %p431 = pneg %p130
      %p432 = pneg %p127
      %p433 = pneg %p151
      %p434 = pneg %p148
      %p435 = pneg %p172
      %p436 = pneg %p169
      %p437 = pneg %p193
      %p438 = pneg %p190
      %p439 = pneg %p214
      %p440 = pneg %p211
      %p441 = pneg %p235
      %p442 = pneg %p232
      %p443 = pneg %p256
      %p444 = pneg %p253
      %p445 = pneg %p277
      %p446 = pneg %p274
      %p447 = pneg %p298
      %p448 = pneg %p295
      %p449 = pneg %p319
      %p450 = pneg %p316
      %p451 = pneg %p345
      %p452 = pneg %p342
      %p453 = scmp.lt.s32.totalorder %s25, 1
      %s454 = scalar_select %p453, %s25, 1
      %s455 = smul.addr %s454, 8
      %s456 = smul.addr %s455, 8
      %s457 = scalar_lea.vmem %s14, %s456
      %p458 = scmp.lt.s32.totalorder %s25, 1
      %s459 = scalar_select %p458, %s25, 1
      %s460 = smul.addr %s459, 4
      %s461 = smul.addr %s460, 8
      %s462 = scalar_lea.vmem %s0, %s461
      %p463 = scmp.lt.s32.totalorder %s25, 1
      %s464 = scalar_select %p463, %s25, 1
      %s465 = smul.addr %s464, 8
      %s466 = smul.addr %s465, 8
      %s467 = scalar_lea.vmem %s14, %s466
      %468 = vst [vmem:[#allocation2] sm:$0xff] 0.0
      %469 = vst [vmem:[#allocation2 + $0x8] sm:$0xff] 0.0
      %vm470 = vcmask 277504
      %471 = vst.msk [vmem:[#allocation2 + $0x10] sm:$0xff] %vm470, 0.0
      %v472 = vld [vmem:[%s462] sm:$0xff]
      %v473 = vld [vmem:[%s462 + $0x8] sm:$0xff]
      %v474 = vld [vmem:[%s462 + $0x10] sm:$0xff]
      %v475 = vld [vmem:[%s462 + $0x18] sm:$0xff]
      %v476 = vld [vmem:[%s13] ss:$2 sm:$0x3]
      %s477 = scalar_lea.vmem %s13, 1
      %v478 = vld [vmem:[%s477] ss:$2 sm:$0x3]
      %v479 = vld [vmem:[%s1] sm:$0xff]
      %v480 = vld [vmem:[%s1 + $0x8] sm:$0xff]
      %v481 = vld [vmem:[%s2] sm:$0xff]
      %v482 = vld [vmem:[%s2 + $0x8] sm:$0xff]
      %484 = vset.pattern.permute.xlu0 0
      %485 = vperm.xlu0 %484, %v481
      %v486 = vpop.permute.xlu0 %485
      %489 = vset.pattern.permute.xlu0 0
      %490 = vperm.xlu0 %489, %v482
      %v491 = vpop.permute.xlu0 %490
      %vm493 = vcmask 130048
      %v495 = vsel %vm493, %v479, 0
      %v498 = vsel %vm493, %v480, 0
      %500 = vmatpush.msra.mxu0 0.0
      %501 = vmatpush.msra.mxu0 0.0
      %502 = vmatpush.msra.mxu0 0.0
      %503 = vmatpush.msra.mxu0 0.0
      %504 = vmatpush.msra.mxu0 0.0
      %505 = vmatpush.msra.mxu0 0.0
      %506 = vmatpush.msra.mxu0 0.0
      %507 = vmatpush.msra.mxu0 0.0
      %508 = vmatpush.msra.mxu0 0.0
      %509 = vmatpush.msra.mxu0 0.0
      %510 = vmatpush.msra.mxu0 0.0
      %511 = vmatpush.msra.mxu0 0.0
      %512 = vmatpush.msra.mxu0 0.0
      %513 = vmatpush.msra.mxu0 0.0
      %514 = vmatpush.msra.mxu0 %v474
      %515 = vmatpush.msra.mxu0 %v472
      %516 = vmatmul.f32.gmra.mxu0 %v495
      %v517 = vpop.f32.mrf.mxu0
      %v518 = vadd.f32 %v486, %v517
      %519 = vmatmul.f32.gmra.mxu0 %v498
      %v520 = vpop.f32.mrf.mxu0
      %v521 = vadd.f32 %v491, %v520
      %522 = vdwg.mxu0
      %523 = vmatpush.msra.mxu0 0.0
      %524 = vmatpush.msra.mxu0 0.0
      %525 = vmatpush.msra.mxu0 0.0
      %526 = vmatpush.msra.mxu0 0.0
      %527 = vmatpush.msra.mxu0 0.0
      %528 = vmatpush.msra.mxu0 0.0
      %529 = vmatpush.msra.mxu0 0.0
      %530 = vmatpush.msra.mxu0 0.0
      %531 = vmatpush.msra.mxu0 0.0
      %532 = vmatpush.msra.mxu0 0.0
      %533 = vmatpush.msra.mxu0 0.0
      %534 = vmatpush.msra.mxu0 0.0
      %535 = vmatpush.msra.mxu0 0.0
      %536 = vmatpush.msra.mxu0 0.0
      %537 = vmatpush.msra.mxu0 %v475
      %538 = vmatpush.msra.mxu0 %v473
      %539 = vmatmul.f32.gmra.mxu0 %v495
      %v540 = vpop.f32.mrf.mxu0
      %v541 = vadd.f32 %v486, %v540
      %542 = vmatmul.f32.gmra.mxu0 %v498
      %v543 = vpop.f32.mrf.mxu0
      %v544 = vadd.f32 %v491, %v543
      %545 = vdwg.mxu0
      %v546 = vsub.f32 0.0, %v518
      %v547 = vsub.f32 0.0, %v541
      %v548 = vsub.f32 0.0, %v521
      %v549 = vsub.f32 0.0, %v544
      %v550 = vmul.f32 %v546, 1.442695
      %v551 = vpow.pop %v550
      %v552 = vmul.f32 %v547, 1.442695
      %v553 = vpow.pop %v552
      %v554 = vmul.f32 %v548, 1.442695
      %v555 = vpow.pop %v554
      %v556 = vmul.f32 %v549, 1.442695
      %v557 = vpow.pop %v556
      %v558 = vadd.f32 %v551, 1.0
      %v559 = vadd.f32 %v553, 1.0
      %v560 = vadd.f32 %v555, 1.0
      %v561 = vadd.f32 %v557, 1.0
      %v562 = vrcp.pop %v558
      %v563 = vmul.f32 %v558, %v562
      %v564 = vsub.f32 1.0, %v563
      %v565 = vmul.f32 %v562, %v564
      %v566 = vadd.f32 %v562, %v565
      %vm567 = vweird.f32 %v558
      %vm568 = vweird.f32 %v562
      %vm569 = vmor %vm567, %vm568
      %v570 = vsel %vm569, %v562, %v566
      %v571 = vand.u32 2147483647, %v558
      %vm572 = vcmp.eq.f32.partialorder %v571, 8.507059e+37
      %v573 = vand.u32 %v558, 2147483648
      %v574 = vor.u32 1.1754944e-38, %v573
      %v575 = vsel %vm572, %v574, %v570
      %v576 = vmul.f32 1.0, %v575
      %v577 = vrcp.pop %v559
      %v578 = vmul.f32 %v559, %v577
      %v579 = vsub.f32 1.0, %v578
      %v580 = vmul.f32 %v577, %v579
      %v581 = vadd.f32 %v577, %v580
      %vm582 = vweird.f32 %v559
      %vm583 = vweird.f32 %v577
      %vm584 = vmor %vm582, %vm583
      %v585 = vsel %vm584, %v577, %v581
      %v586 = vand.u32 2147483647, %v559
      %vm587 = vcmp.eq.f32.partialorder %v586, 8.507059e+37
      %v588 = vand.u32 %v559, 2147483648
      %v589 = vor.u32 1.1754944e-38, %v588
      %v590 = vsel %vm587, %v589, %v585
      %v591 = vmul.f32 1.0, %v590
      %v592 = vrcp.pop %v560
      %v593 = vmul.f32 %v560, %v592
      %v594 = vsub.f32 1.0, %v593
      %v595 = vmul.f32 %v592, %v594
      %v596 = vadd.f32 %v592, %v595
      %vm597 = vweird.f32 %v560
      %vm598 = vweird.f32 %v592
      %vm599 = vmor %vm597, %vm598
      %v600 = vsel %vm599, %v592, %v596
      %v601 = vand.u32 2147483647, %v560
      %vm602 = vcmp.eq.f32.partialorder %v601, 8.507059e+37
      %v603 = vand.u32 %v560, 2147483648
      %v604 = vor.u32 1.1754944e-38, %v603
      %v605 = vsel %vm602, %v604, %v600
      %v606 = vmul.f32 1.0, %v605
      %v607 = vrcp.pop %v561
      %v608 = vmul.f32 %v561, %v607
      %v609 = vsub.f32 1.0, %v608
      %v610 = vmul.f32 %v607, %v609
      %v611 = vadd.f32 %v607, %v610
      %vm612 = vweird.f32 %v561
      %vm613 = vweird.f32 %v607
      %vm614 = vmor %vm612, %vm613
      %v615 = vsel %vm614, %v607, %v611
      %v616 = vand.u32 2147483647, %v561
      %vm617 = vcmp.eq.f32.partialorder %v616, 8.507059e+37
      %v618 = vand.u32 %v561, 2147483648
      %v619 = vor.u32 1.1754944e-38, %v618
      %v620 = vsel %vm617, %v619, %v615
      %v621 = vmul.f32 1.0, %v620
      %v622 = vmul.f32 %v518, %v576
      %v623 = vmul.f32 %v541, %v591
      %v624 = vmul.f32 %v521, %v606
      %v625 = vmul.f32 %v544, %v621
      %628 = vrot.lane.b32.xlu0 %v624, 17
      %v629 = vpop.permute.xlu0 %628
      %630 = vrot.lane.b32.xlu0 %v625, 17
      %v631 = vpop.permute.xlu0 %630
      %vm632 = vcmask 138240
      %v633 = vsel %vm632, %v629, %v631
      %vm637 = vcmask 1047688
      %638 = vst.msk [vmem:[#allocation2] sm:$0xff] %vm637, %v629
      %639 = vst [vmem:[#allocation2 + $0x8] sm:$0xff] %v633
      %640 = vst.msk [vmem:[#allocation2 + $0x10] sm:$0xff] %vm632, %v631
      %v641 = vld [vmem:[#allocation2] sm:$0xff]
      %v642 = vld [vmem:[#allocation2 + $0x8] sm:$0xff]
      %v644 = vperm.slane %v476, 0
      %v645 = vperm.slane %v476, 1
      %v648 = vmul.f32 %v641, %v644
      %v649 = vmul.f32 %v642, %v645
      %650 = vst [vmem:[#allocation3] sm:$0xff] %v648
      %651 = vst [vmem:[#allocation3 + $0x8] sm:$0xff] %v649
      %v652 = vld [vmem:[#allocation2] sm:$0xff]
      %v653 = vld [vmem:[#allocation2 + $0x8] sm:$0xff]
      %v654 = vld [vmem:[#allocation2 + $0x10] sm:$0xff]
      %658 = vrot.lane.b32.xlu0 %v652, 127
      %v659 = vpop.permute.xlu0 %658
      %660 = vrot.lane.b32.xlu0 %v653, 127
      %v661 = vpop.permute.xlu0 %660
      %662 = vrot.lane.b32.xlu0 %v654, 127
      %v663 = vpop.permute.xlu0 %662
      %vm664 = vcmask 1039360
      %v665 = vsel %vm664, %v659, %v661
      %v666 = vsel %vm664, %v661, %v663
      %669 = vst [vmem:[#allocation3 + $0x10] sm:$0xff] %v665
      %670 = vst [vmem:[#allocation3 + $0x18] sm:$0xff] %v666
      %v671 = vld [vmem:[#allocation2] sm:$0xff]
      %v672 = vld [vmem:[#allocation2 + $0x8] sm:$0xff]
      %v673 = vld [vmem:[#allocation2 + $0x10] sm:$0xff]
      %v675 = vperm.slane %v478, 0
      %v676 = vperm.slane %v478, 1
      %677 = vrot.lane.b32.xlu0 %v675, 2
      %v678 = vpop.permute.xlu0 %677
      %679 = vrot.lane.b32.xlu0 %v676, 2
      %v680 = vpop.permute.xlu0 %679
      %vm681 = vcmask 15360
      %v682 = vsel %vm681, %v678, %v680
      %v686 = vmul.f32 %v671, %v678
      %v687 = vmul.f32 %v672, %v682
      %v688 = vmul.f32 %v673, %v680
      %692 = vrot.lane.b32.xlu0 %v686, 126
      %v693 = vpop.permute.xlu0 %692
      %694 = vrot.lane.b32.xlu0 %v687, 126
      %v695 = vpop.permute.xlu0 %694
      %696 = vrot.lane.b32.xlu0 %v688, 126
      %v697 = vpop.permute.xlu0 %696
      %vm698 = vcmask 1031168
      %v699 = vsel %vm698, %v693, %v695
      %v700 = vsel %vm698, %v695, %v697
      %703 = vst [vmem:[#allocation3 + $0x20] sm:$0xff] %v699
      %704 = vst [vmem:[#allocation3 + $0x28] sm:$0xff] %v700
      %v705 = vld [vmem:[#allocation2] sm:$0xff]
      %v706 = vld [vmem:[#allocation2 + $0x8] sm:$0xff]
      %v707 = vld [vmem:[#allocation2 + $0x10] sm:$0xff]
      %708 = vrot.lane.b32.xlu0 %v644, 16
      %v709 = vpop.permute.xlu0 %708
      %710 = vrot.lane.b32.xlu0 %v645, 16
      %v711 = vpop.permute.xlu0 %710
      %v712 = vsel %vm493, %v709, %v711
      %v716 = vmul.f32 %v705, %v709
      %v717 = vmul.f32 %v706, %v712
      %v718 = vmul.f32 %v707, %v711
      %722 = vrot.lane.b32.xlu0 %v716, 112
      %v723 = vpop.permute.xlu0 %722
      %724 = vrot.lane.b32.xlu0 %v717, 112
      %v725 = vpop.permute.xlu0 %724
      %726 = vrot.lane.b32.xlu0 %v718, 112
      %v727 = vpop.permute.xlu0 %726
      %vm728 = vcmask 916480
      %v729 = vsel %vm728, %v723, %v725
      %v730 = vsel %vm728, %v725, %v727
      %733 = vst [vmem:[#allocation3 + $0x30] sm:$0xff] %v729
      %734 = vst [vmem:[#allocation3 + $0x38] sm:$0xff] %v730
      %v735 = vld [vmem:[#allocation2] sm:$0xff]
      %v736 = vld [vmem:[#allocation2 + $0x8] sm:$0xff]
      %v737 = vld [vmem:[#allocation2 + $0x10] sm:$0xff]
      %741 = vrot.lane.b32.xlu0 %v735, 111
      %v742 = vpop.permute.xlu0 %741
      %743 = vrot.lane.b32.xlu0 %v736, 111
      %v744 = vpop.permute.xlu0 %743
      %745 = vrot.lane.b32.xlu0 %v737, 111
      %v746 = vpop.permute.xlu0 %745
      %vm747 = vcmask 908288
      %v748 = vsel %vm747, %v742, %v744
      %v749 = vsel %vm747, %v744, %v746
      %752 = vst [vmem:[#allocation3 + $0x40] sm:$0xff] %v748
      %753 = vst [vmem:[#allocation3 + $0x48] sm:$0xff] %v749
      %v754 = vld [vmem:[#allocation2] sm:$0xff]
      %v755 = vld [vmem:[#allocation2 + $0x8] sm:$0xff]
      %v756 = vld [vmem:[#allocation2 + $0x10] sm:$0xff]
      %757 = vrot.lane.b32.xlu0 %v675, 18
      %v758 = vpop.permute.xlu0 %757
      %759 = vrot.lane.b32.xlu0 %v676, 18
      %v760 = vpop.permute.xlu0 %759
      %vm761 = vcmask 146432
      %v762 = vsel %vm761, %v758, %v760
      %v766 = vmul.f32 %v754, %v758
      %v767 = vmul.f32 %v755, %v762
      %v768 = vmul.f32 %v756, %v760
      %772 = vrot.lane.b32.xlu0 %v766, 110
      %v773 = vpop.permute.xlu0 %772
      %774 = vrot.lane.b32.xlu0 %v767, 110
      %v775 = vpop.permute.xlu0 %774
      %776 = vrot.lane.b32.xlu0 %v768, 110
      %v777 = vpop.permute.xlu0 %776
      %vm778 = vcmask 900096
      %v779 = vsel %vm778, %v773, %v775
      %v780 = vsel %vm778, %v775, %v777
      %783 = vst [vmem:[#allocation3 + $0x50] sm:$0xff] %v779
      %784 = vst [vmem:[#allocation3 + $0x58] sm:$0xff] %v780
      %v785 = vld [vmem:[#allocation2] sm:$0xff]
      %v786 = vld [vmem:[#allocation2 + $0x8] sm:$0xff]
      %v787 = vld [vmem:[#allocation2 + $0x10] sm:$0xff]
      %788 = vrot.lane.b32.xlu0 %v644, 32
      %v789 = vpop.permute.xlu0 %788
      %790 = vrot.lane.b32.xlu0 %v645, 32
      %v791 = vpop.permute.xlu0 %790
      %vm792 = vcmask 261120
      %v793 = vsel %vm792, %v789, %v791
      %v797 = vmul.f32 %v785, %v789
      %v798 = vmul.f32 %v786, %v793
      %v799 = vmul.f32 %v787, %v791
      %803 = vrot.lane.b32.xlu0 %v797, 96
      %v804 = vpop.permute.xlu0 %803
      %805 = vrot.lane.b32.xlu0 %v798, 96
      %v806 = vpop.permute.xlu0 %805
      %807 = vrot.lane.b32.xlu0 %v799, 96
      %v808 = vpop.permute.xlu0 %807
      %vm809 = vcmask 785408
      %v810 = vsel %vm809, %v804, %v806
      %v811 = vsel %vm809, %v806, %v808
      %814 = vst [vmem:[#allocation3 + $0x60] sm:$0xff] %v810
      %815 = vst [vmem:[#allocation3 + $0x68] sm:$0xff] %v811
      %v816 = vld [vmem:[#allocation2] sm:$0xff]
      %v817 = vld [vmem:[#allocation2 + $0x8] sm:$0xff]
      %v818 = vld [vmem:[#allocation2 + $0x10] sm:$0xff]
      %822 = vrot.lane.b32.xlu0 %v816, 95
      %v823 = vpop.permute.xlu0 %822
      %824 = vrot.lane.b32.xlu0 %v817, 95
      %v825 = vpop.permute.xlu0 %824
      %826 = vrot.lane.b32.xlu0 %v818, 95
      %v827 = vpop.permute.xlu0 %826
      %vm828 = vcmask 777216
      %v829 = vsel %vm828, %v823, %v825
      %v830 = vsel %vm828, %v825, %v827
      %833 = vst [vmem:[#allocation3 + $0x70] sm:$0xff] %v829
      %834 = vst [vmem:[#allocation3 + $0x78] sm:$0xff] %v830
      %v835 = vld [vmem:[#allocation2] sm:$0xff]
      %v836 = vld [vmem:[#allocation2 + $0x8] sm:$0xff]
      %v837 = vld [vmem:[#allocation2 + $0x10] sm:$0xff]
      %838 = vrot.lane.b32.xlu0 %v675, 34
      %v839 = vpop.permute.xlu0 %838
      %840 = vrot.lane.b32.xlu0 %v676, 34
      %v841 = vpop.permute.xlu0 %840
      %v842 = vsel %vm470, %v839, %v841
      %v846 = vmul.f32 %v835, %v839
      %v847 = vmul.f32 %v836, %v842
      %v848 = vmul.f32 %v837, %v841
      %852 = vrot.lane.b32.xlu0 %v846, 94
      %v853 = vpop.permute.xlu0 %852
      %854 = vrot.lane.b32.xlu0 %v847, 94
      %v855 = vpop.permute.xlu0 %854
      %856 = vrot.lane.b32.xlu0 %v848, 94
      %v857 = vpop.permute.xlu0 %856
      %vm858 = vcmask 769024
      %v859 = vsel %vm858, %v853, %v855
      %v860 = vsel %vm858, %v855, %v857
      %863 = vst [vmem:[#allocation3 + $0x80] sm:$0xff] %v859
      %864 = vst [vmem:[#allocation3 + $0x88] sm:$0xff] %v860
      %v865 = vld [vmem:[%s3] sm:$0xff]
      %v866 = vld [vmem:[#allocation3] sm:$0xff]
      %v867 = vld [vmem:[#allocation3 + $0x8] sm:$0xff]
      %v868 = vld [vmem:[#allocation3 + $0x10] sm:$0xff]
      %v869 = vld [vmem:[#allocation3 + $0x18] sm:$0xff]
      %v870 = vld [vmem:[#allocation3 + $0x20] sm:$0xff]
      %v871 = vld [vmem:[#allocation3 + $0x28] sm:$0xff]
      %v872 = vld [vmem:[#allocation3 + $0x30] sm:$0xff]
      %v873 = vld [vmem:[#allocation3 + $0x38] sm:$0xff]
      %v874 = vld [vmem:[#allocation3 + $0x40] sm:$0xff]
      %v875 = vld [vmem:[#allocation3 + $0x48] sm:$0xff]
      %v876 = vld [vmem:[#allocation3 + $0x50] sm:$0xff]
      %v877 = vld [vmem:[#allocation3 + $0x58] sm:$0xff]
      %v878 = vld [vmem:[#allocation3 + $0x60] sm:$0xff]
      %v879 = vld [vmem:[#allocation3 + $0x68] sm:$0xff]
      %v880 = vld [vmem:[#allocation3 + $0x70] sm:$0xff]
      %v881 = vld [vmem:[#allocation3 + $0x78] sm:$0xff]
      %v882 = vld [vmem:[#allocation3 + $0x80] sm:$0xff]
      %v883 = vld [vmem:[#allocation3 + $0x88] sm:$0xff]
      %v884 = vld [vmem:[%s4] sm:$0xff]
      %886 = vset.pattern.permute.xlu0 0
      %887 = vperm.xlu0 %886, %v884
      %v888 = vpop.permute.xlu0 %887
      %vm890 = vcmask 588800
      %v892 = vsel %vm890, %v865, 0
      %894 = vmatpush.msra.mxu0 0.0
      %895 = vmatpush.msra.mxu0 0.0
      %896 = vmatpush.msra.mxu0 0.0
      %897 = vmatpush.msra.mxu0 0.0
      %898 = vmatpush.msra.mxu0 0.0
      %899 = vmatpush.msra.mxu0 0.0
      %900 = vmatpush.msra.mxu0 0.0
      %901 = vmatpush.msra.mxu0 %v882
      %902 = vmatpush.msra.mxu0 %v880
      %903 = vmatpush.msra.mxu0 %v878
      %904 = vmatpush.msra.mxu0 %v876
      %905 = vmatpush.msra.mxu0 %v874
      %906 = vmatpush.msra.mxu0 %v872
      %907 = vmatpush.msra.mxu0 %v870
      %908 = vmatpush.msra.mxu0 %v868
      %909 = vmatpush.msra.mxu0 %v866
      %910 = vmatmul.f32.gmra.mxu0 %v892
      %v911 = vpop.f32.mrf.mxu0
      %v912 = vadd.f32 %v888, %v911
      %913 = vdwg.mxu0
      %914 = vmatpush.msra.mxu0 0.0
      %915 = vmatpush.msra.mxu0 0.0
      %916 = vmatpush.msra.mxu0 0.0
      %917 = vmatpush.msra.mxu0 0.0
      %918 = vmatpush.msra.mxu0 0.0
      %919 = vmatpush.msra.mxu0 0.0
      %920 = vmatpush.msra.mxu0 0.0
      %921 = vmatpush.msra.mxu0 %v883
      %922 = vmatpush.msra.mxu0 %v881
      %923 = vmatpush.msra.mxu0 %v879
      %924 = vmatpush.msra.mxu0 %v877
      %925 = vmatpush.msra.mxu0 %v875
      %926 = vmatpush.msra.mxu0 %v873
      %927 = vmatpush.msra.mxu0 %v871
      %928 = vmatpush.msra.mxu0 %v869
      %929 = vmatpush.msra.mxu0 %v867
      %930 = vmatmul.f32.gmra.mxu0 %v892
      %v931 = vpop.f32.mrf.mxu0
      %v932 = vadd.f32 %v888, %v931
      %933 = vdwg.mxu0
      %v934 = vsub.f32 0.0, %v912
      %v935 = vsub.f32 0.0, %v932
      %v936 = vmul.f32 %v934, 1.442695
      %v937 = vpow.pop %v936
      %v938 = vmul.f32 %v935, 1.442695
      %v939 = vpow.pop %v938
      %v940 = vadd.f32 %v937, 1.0
      %v941 = vadd.f32 %v939, 1.0
      %v942 = vrcp.pop %v940
      %v943 = vmul.f32 %v940, %v942
      %v944 = vsub.f32 1.0, %v943
      %v945 = vmul.f32 %v942, %v944
      %v946 = vadd.f32 %v942, %v945
      %vm947 = vweird.f32 %v940
      %vm948 = vweird.f32 %v942
      %vm949 = vmor %vm947, %vm948
      %v950 = vsel %vm949, %v942, %v946
      %v951 = vand.u32 2147483647, %v940
      %vm952 = vcmp.eq.f32.partialorder %v951, 8.507059e+37
      %v953 = vand.u32 %v940, 2147483648
      %v954 = vor.u32 1.1754944e-38, %v953
      %v955 = vsel %vm952, %v954, %v950
      %v956 = vmul.f32 1.0, %v955
      %v957 = vrcp.pop %v941
      %v958 = vmul.f32 %v941, %v957
      %v959 = vsub.f32 1.0, %v958
      %v960 = vmul.f32 %v957, %v959
      %v961 = vadd.f32 %v957, %v960
      %vm962 = vweird.f32 %v941
      %vm963 = vweird.f32 %v957
      %vm964 = vmor %vm962, %vm963
      %v965 = vsel %vm964, %v957, %v961
      %v966 = vand.u32 2147483647, %v941
      %vm967 = vcmp.eq.f32.partialorder %v966, 8.507059e+37
      %v968 = vand.u32 %v941, 2147483648
      %v969 = vor.u32 1.1754944e-38, %v968
      %v970 = vsel %vm967, %v969, %v965
      %v971 = vmul.f32 1.0, %v970
      %v972 = vmul.f32 %v912, %v956
      %v973 = vmul.f32 %v932, %v971
      %976 = vrot.lane.b32.xlu0 %v972, 17
      %v977 = vpop.permute.xlu0 %976
      %978 = vrot.lane.b32.xlu0 %v973, 17
      %v979 = vpop.permute.xlu0 %978
      %v980 = vsel %vm632, %v977, %v979
      %984 = vst.msk [vmem:[#allocation2] sm:$0xff] %vm637, %v977
      %985 = vst [vmem:[#allocation2 + $0x8] sm:$0xff] %v980
      %986 = vst.msk [vmem:[#allocation2 + $0x10] sm:$0xff] %vm632, %v979
      %v987 = vld [vmem:[#allocation2] sm:$0xff]
      %v988 = vld [vmem:[#allocation2 + $0x8] sm:$0xff]
      %v989 = vmul.f32 %v987, %v644
      %v990 = vmul.f32 %v988, %v645
      %991 = vst [vmem:[#allocation3] sm:$0xff] %v989
      %992 = vst [vmem:[#allocation3 + $0x8] sm:$0xff] %v990
      %v993 = vld [vmem:[#allocation2] sm:$0xff]
      %v994 = vld [vmem:[#allocation2 + $0x8] sm:$0xff]
      %v995 = vld [vmem:[#allocation2 + $0x10] sm:$0xff]
      %999 = vrot.lane.b32.xlu0 %v993, 127
      %v1000 = vpop.permute.xlu0 %999
      %1001 = vrot.lane.b32.xlu0 %v994, 127
      %v1002 = vpop.permute.xlu0 %1001
      %1003 = vrot.lane.b32.xlu0 %v995, 127
      %v1004 = vpop.permute.xlu0 %1003
      %v1005 = vsel %vm664, %v1000, %v1002
      %v1006 = vsel %vm664, %v1002, %v1004
      %1009 = vst [vmem:[#allocation3 + $0x10] sm:$0xff] %v1005
      %1010 = vst [vmem:[#allocation3 + $0x18] sm:$0xff] %v1006
      %v1011 = vld [vmem:[#allocation2] sm:$0xff]
      %v1012 = vld [vmem:[#allocation2 + $0x8] sm:$0xff]
      %v1013 = vld [vmem:[#allocation2 + $0x10] sm:$0xff]
      %v1014 = vmul.f32 %v1011, %v678
      %v1015 = vmul.f32 %v1012, %v682
      %v1016 = vmul.f32 %v1013, %v680
      %1020 = vrot.lane.b32.xlu0 %v1014, 126
      %v1021 = vpop.permute.xlu0 %1020
      %1022 = vrot.lane.b32.xlu0 %v1015, 126
      %v1023 = vpop.permute.xlu0 %1022
      %1024 = vrot.lane.b32.xlu0 %v1016, 126
      %v1025 = vpop.permute.xlu0 %1024
      %v1026 = vsel %vm698, %v1021, %v1023
      %v1027 = vsel %vm698, %v1023, %v1025
      %1030 = vst [vmem:[#allocation3 + $0x20] sm:$0xff] %v1026
      %1031 = vst [vmem:[#allocation3 + $0x28] sm:$0xff] %v1027
      %v1032 = vld [vmem:[#allocation2] sm:$0xff]
      %v1033 = vld [vmem:[#allocation2 + $0x8] sm:$0xff]
      %v1034 = vld [vmem:[#allocation2 + $0x10] sm:$0xff]
      %v1035 = vmul.f32 %v1032, %v709
      %v1036 = vmul.f32 %v1033, %v712
      %v1037 = vmul.f32 %v1034, %v711
      %1041 = vrot.lane.b32.xlu0 %v1035, 112
      %v1042 = vpop.permute.xlu0 %1041
      %1043 = vrot.lane.b32.xlu0 %v1036, 112
      %v1044 = vpop.permute.xlu0 %1043
      %1045 = vrot.lane.b32.xlu0 %v1037, 112
      %v1046 = vpop.permute.xlu0 %1045
      %v1047 = vsel %vm728, %v1042, %v1044
      %v1048 = vsel %vm728, %v1044, %v1046
      %1051 = vst [vmem:[#allocation3 + $0x30] sm:$0xff] %v1047
      %1052 = vst [vmem:[#allocation3 + $0x38] sm:$0xff] %v1048
      %v1053 = vld [vmem:[#allocation2] sm:$0xff]
      %v1054 = vld [vmem:[#allocation2 + $0x8] sm:$0xff]
      %v1055 = vld [vmem:[#allocation2 + $0x10] sm:$0xff]
      %1059 = vrot.lane.b32.xlu0 %v1053, 111
      %v1060 = vpop.permute.xlu0 %1059
      %1061 = vrot.lane.b32.xlu0 %v1054, 111
      %v1062 = vpop.permute.xlu0 %1061
      %1063 = vrot.lane.b32.xlu0 %v1055, 111
      %v1064 = vpop.permute.xlu0 %1063
      %v1065 = vsel %vm747, %v1060, %v1062
      %v1066 = vsel %vm747, %v1062, %v1064
      %1069 = vst [vmem:[#allocation3 + $0x40] sm:$0xff] %v1065
      %1070 = vst [vmem:[#allocation3 + $0x48] sm:$0xff] %v1066
      %v1071 = vld [vmem:[#allocation2] sm:$0xff]
      %v1072 = vld [vmem:[#allocation2 + $0x8] sm:$0xff]
      %v1073 = vld [vmem:[#allocation2 + $0x10] sm:$0xff]
      %v1074 = vmul.f32 %v1071, %v758
      %v1075 = vmul.f32 %v1072, %v762
      %v1076 = vmul.f32 %v1073, %v760
      %1080 = vrot.lane.b32.xlu0 %v1074, 110
      %v1081 = vpop.permute.xlu0 %1080
      %1082 = vrot.lane.b32.xlu0 %v1075, 110
      %v1083 = vpop.permute.xlu0 %1082
      %1084 = vrot.lane.b32.xlu0 %v1076, 110
      %v1085 = vpop.permute.xlu0 %1084
      %v1086 = vsel %vm778, %v1081, %v1083
      %v1087 = vsel %vm778, %v1083, %v1085
      %1090 = vst [vmem:[#allocation3 + $0x50] sm:$0xff] %v1086
      %1091 = vst [vmem:[#allocation3 + $0x58] sm:$0xff] %v1087
      %v1092 = vld [vmem:[#allocation2] sm:$0xff]
      %v1093 = vld [vmem:[#allocation2 + $0x8] sm:$0xff]
      %v1094 = vld [vmem:[#allocation2 + $0x10] sm:$0xff]
      %v1095 = vmul.f32 %v1092, %v789
      %v1096 = vmul.f32 %v1093, %v793
      %v1097 = vmul.f32 %v1094, %v791
      %1101 = vrot.lane.b32.xlu0 %v1095, 96
      %v1102 = vpop.permute.xlu0 %1101
      %1103 = vrot.lane.b32.xlu0 %v1096, 96
      %v1104 = vpop.permute.xlu0 %1103
      %1105 = vrot.lane.b32.xlu0 %v1097, 96
      %v1106 = vpop.permute.xlu0 %1105
      %v1107 = vsel %vm809, %v1102, %v1104
      %v1108 = vsel %vm809, %v1104, %v1106
      %1111 = vst [vmem:[#allocation3 + $0x60] sm:$0xff] %v1107
      %1112 = vst [vmem:[#allocation3 + $0x68] sm:$0xff] %v1108
      %v1113 = vld [vmem:[#allocation2] sm:$0xff]
      %v1114 = vld [vmem:[#allocation2 + $0x8] sm:$0xff]
      %v1115 = vld [vmem:[#allocation2 + $0x10] sm:$0xff]
      %1119 = vrot.lane.b32.xlu0 %v1113, 95
      %v1120 = vpop.permute.xlu0 %1119
      %1121 = vrot.lane.b32.xlu0 %v1114, 95
      %v1122 = vpop.permute.xlu0 %1121
      %1123 = vrot.lane.b32.xlu0 %v1115, 95
      %v1124 = vpop.permute.xlu0 %1123
      %v1125 = vsel %vm828, %v1120, %v1122
      %v1126 = vsel %vm828, %v1122, %v1124
      %1129 = vst [vmem:[#allocation3 + $0x70] sm:$0xff] %v1125
      %1130 = vst [vmem:[#allocation3 + $0x78] sm:$0xff] %v1126
      %v1131 = vld [vmem:[#allocation2] sm:$0xff]
      %v1132 = vld [vmem:[#allocation2 + $0x8] sm:$0xff]
      %v1133 = vld [vmem:[#allocation2 + $0x10] sm:$0xff]
      %v1134 = vmul.f32 %v1131, %v839
      %v1135 = vmul.f32 %v1132, %v842
      %v1136 = vmul.f32 %v1133, %v841
      %1140 = vrot.lane.b32.xlu0 %v1134, 94
      %v1141 = vpop.permute.xlu0 %1140
      %1142 = vrot.lane.b32.xlu0 %v1135, 94
      %v1143 = vpop.permute.xlu0 %1142
      %1144 = vrot.lane.b32.xlu0 %v1136, 94
      %v1145 = vpop.permute.xlu0 %1144
      %v1146 = vsel %vm858, %v1141, %v1143
      %v1147 = vsel %vm858, %v1143, %v1145
      %1150 = vst [vmem:[#allocation3 + $0x80] sm:$0xff] %v1146
      %1151 = vst [vmem:[#allocation3 + $0x88] sm:$0xff] %v1147
      %v1152 = vld [vmem:[%s5] sm:$0xff]
      %v1153 = vld [vmem:[#allocation3] sm:$0xff]
      %v1154 = vld [vmem:[#allocation3 + $0x8] sm:$0xff]
      %v1155 = vld [vmem:[#allocation3 + $0x10] sm:$0xff]
      %v1156 = vld [vmem:[#allocation3 + $0x18] sm:$0xff]
      %v1157 = vld [vmem:[#allocation3 + $0x20] sm:$0xff]
      %v1158 = vld [vmem:[#allocation3 + $0x28] sm:$0xff]
      %v1159 = vld [vmem:[#allocation3 + $0x30] sm:$0xff]
      %v1160 = vld [vmem:[#allocation3 + $0x38] sm:$0xff]
      %v1161 = vld [vmem:[#allocation3 + $0x40] sm:$0xff]
      %v1162 = vld [vmem:[#allocation3 + $0x48] sm:$0xff]
      %v1163 = vld [vmem:[#allocation3 + $0x50] sm:$0xff]
      %v1164 = vld [vmem:[#allocation3 + $0x58] sm:$0xff]
      %v1165 = vld [vmem:[#allocation3 + $0x60] sm:$0xff]
      %v1166 = vld [vmem:[#allocation3 + $0x68] sm:$0xff]
      %v1167 = vld [vmem:[#allocation3 + $0x70] sm:$0xff]
      %v1168 = vld [vmem:[#allocation3 + $0x78] sm:$0xff]
      %v1169 = vld [vmem:[#allocation3 + $0x80] sm:$0xff]
      %v1170 = vld [vmem:[#allocation3 + $0x88] sm:$0xff]
      %v1171 = vld [vmem:[%s6] sm:$0xff]
      %1173 = vset.pattern.permute.xlu0 0
      %1174 = vperm.xlu0 %1173, %v1171
      %v1175 = vpop.permute.xlu0 %1174
      %v1178 = vsel %vm890, %v1152, 0
      %1180 = vmatpush.msra.mxu0 0.0
      %1181 = vmatpush.msra.mxu0 0.0
      %1182 = vmatpush.msra.mxu0 0.0
      %1183 = vmatpush.msra.mxu0 0.0
      %1184 = vmatpush.msra.mxu0 0.0
      %1185 = vmatpush.msra.mxu0 0.0
      %1186 = vmatpush.msra.mxu0 0.0
      %1187 = vmatpush.msra.mxu0 %v1169
      %1188 = vmatpush.msra.mxu0 %v1167
      %1189 = vmatpush.msra.mxu0 %v1165
      %1190 = vmatpush.msra.mxu0 %v1163
      %1191 = vmatpush.msra.mxu0 %v1161
      %1192 = vmatpush.msra.mxu0 %v1159
      %1193 = vmatpush.msra.mxu0 %v1157
      %1194 = vmatpush.msra.mxu0 %v1155
      %1195 = vmatpush.msra.mxu0 %v1153
      %1196 = vmatmul.f32.gmra.mxu0 %v1178
      %v1197 = vpop.f32.mrf.mxu0
      %v1198 = vadd.f32 %v1175, %v1197
      %1199 = vdwg.mxu0
      %1200 = vmatpush.msra.mxu0 0.0
      %1201 = vmatpush.msra.mxu0 0.0
      %1202 = vmatpush.msra.mxu0 0.0
      %1203 = vmatpush.msra.mxu0 0.0
      %1204 = vmatpush.msra.mxu0 0.0
      %1205 = vmatpush.msra.mxu0 0.0
      %1206 = vmatpush.msra.mxu0 0.0
      %1207 = vmatpush.msra.mxu0 %v1170
      %1208 = vmatpush.msra.mxu0 %v1168
      %1209 = vmatpush.msra.mxu0 %v1166
      %1210 = vmatpush.msra.mxu0 %v1164
      %1211 = vmatpush.msra.mxu0 %v1162
      %1212 = vmatpush.msra.mxu0 %v1160
      %1213 = vmatpush.msra.mxu0 %v1158
      %1214 = vmatpush.msra.mxu0 %v1156
      %1215 = vmatpush.msra.mxu0 %v1154
      %1216 = vmatmul.f32.gmra.mxu0 %v1178
      %v1217 = vpop.f32.mrf.mxu0
      %v1218 = vadd.f32 %v1175, %v1217
      %1219 = vdwg.mxu0
      %v1220 = vsub.f32 0.0, %v1198
      %v1221 = vsub.f32 0.0, %v1218
      %v1222 = vmul.f32 %v1220, 1.442695
      %v1223 = vpow.pop %v1222
      %v1224 = vmul.f32 %v1221, 1.442695
      %v1225 = vpow.pop %v1224
      %v1226 = vadd.f32 %v1223, 1.0
      %v1227 = vadd.f32 %v1225, 1.0
      %v1228 = vrcp.pop %v1226
      %v1229 = vmul.f32 %v1226, %v1228
      %v1230 = vsub.f32 1.0, %v1229
      %v1231 = vmul.f32 %v1228, %v1230
      %v1232 = vadd.f32 %v1228, %v1231
      %vm1233 = vweird.f32 %v1226
      %vm1234 = vweird.f32 %v1228
      %vm1235 = vmor %vm1233, %vm1234
      %v1236 = vsel %vm1235, %v1228, %v1232
      %v1237 = vand.u32 2147483647, %v1226
      %vm1238 = vcmp.eq.f32.partialorder %v1237, 8.507059e+37
      %v1239 = vand.u32 %v1226, 2147483648
      %v1240 = vor.u32 1.1754944e-38, %v1239
      %v1241 = vsel %vm1238, %v1240, %v1236
      %v1242 = vmul.f32 1.0, %v1241
      %v1243 = vrcp.pop %v1227
      %v1244 = vmul.f32 %v1227, %v1243
      %v1245 = vsub.f32 1.0, %v1244
      %v1246 = vmul.f32 %v1243, %v1245
      %v1247 = vadd.f32 %v1243, %v1246
      %vm1248 = vweird.f32 %v1227
      %vm1249 = vweird.f32 %v1243
      %vm1250 = vmor %vm1248, %vm1249
      %v1251 = vsel %vm1250, %v1243, %v1247
      %v1252 = vand.u32 2147483647, %v1227
      %vm1253 = vcmp.eq.f32.partialorder %v1252, 8.507059e+37
      %v1254 = vand.u32 %v1227, 2147483648
      %v1255 = vor.u32 1.1754944e-38, %v1254
      %v1256 = vsel %vm1253, %v1255, %v1251
      %v1257 = vmul.f32 1.0, %v1256
      %v1258 = vmul.f32 %v1198, %v1242
      %v1259 = vmul.f32 %v1218, %v1257
      %1262 = vrot.lane.b32.xlu0 %v1258, 17
      %v1263 = vpop.permute.xlu0 %1262
      %1264 = vrot.lane.b32.xlu0 %v1259, 17
      %v1265 = vpop.permute.xlu0 %1264
      %v1266 = vsel %vm632, %v1263, %v1265
      %1270 = vst.msk [vmem:[#allocation2] sm:$0xff] %vm637, %v1263
      %1271 = vst [vmem:[#allocation2 + $0x8] sm:$0xff] %v1266
      %1272 = vst.msk [vmem:[#allocation2 + $0x10] sm:$0xff] %vm632, %v1265
      %v1273 = vld [vmem:[#allocation2] sm:$0xff]
      %v1274 = vld [vmem:[#allocation2 + $0x8] sm:$0xff]
      %v1275 = vmul.f32 %v1273, %v644
      %v1276 = vmul.f32 %v1274, %v645
      %1277 = vst [vmem:[#allocation3] sm:$0xff] %v1275
      %1278 = vst [vmem:[#allocation3 + $0x8] sm:$0xff] %v1276
      %v1279 = vld [vmem:[#allocation2] sm:$0xff]
      %v1280 = vld [vmem:[#allocation2 + $0x8] sm:$0xff]
      %v1281 = vld [vmem:[#allocation2 + $0x10] sm:$0xff]
      %1285 = vrot.lane.b32.xlu0 %v1279, 127
      %v1286 = vpop.permute.xlu0 %1285
      %1287 = vrot.lane.b32.xlu0 %v1280, 127
      %v1288 = vpop.permute.xlu0 %1287
      %1289 = vrot.lane.b32.xlu0 %v1281, 127
      %v1290 = vpop.permute.xlu0 %1289
      %v1291 = vsel %vm664, %v1286, %v1288
      %v1292 = vsel %vm664, %v1288, %v1290
      %1295 = vst [vmem:[#allocation3 + $0x10] sm:$0xff] %v1291
      %1296 = vst [vmem:[#allocation3 + $0x18] sm:$0xff] %v1292
      %v1297 = vld [vmem:[#allocation2] sm:$0xff]
      %v1298 = vld [vmem:[#allocation2 + $0x8] sm:$0xff]
      %v1299 = vld [vmem:[#allocation2 + $0x10] sm:$0xff]
      %v1300 = vmul.f32 %v1297, %v678
      %v1301 = vmul.f32 %v1298, %v682
      %v1302 = vmul.f32 %v1299, %v680
      %1306 = vrot.lane.b32.xlu0 %v1300, 126
      %v1307 = vpop.permute.xlu0 %1306
      %1308 = vrot.lane.b32.xlu0 %v1301, 126
      %v1309 = vpop.permute.xlu0 %1308
      %1310 = vrot.lane.b32.xlu0 %v1302, 126
      %v1311 = vpop.permute.xlu0 %1310
      %v1312 = vsel %vm698, %v1307, %v1309
      %v1313 = vsel %vm698, %v1309, %v1311
      %1316 = vst [vmem:[#allocation3 + $0x20] sm:$0xff] %v1312
      %1317 = vst [vmem:[#allocation3 + $0x28] sm:$0xff] %v1313
      %v1318 = vld [vmem:[#allocation2] sm:$0xff]
      %v1319 = vld [vmem:[#allocation2 + $0x8] sm:$0xff]
      %v1320 = vld [vmem:[#allocation2 + $0x10] sm:$0xff]
      %v1321 = vmul.f32 %v1318, %v709
      %v1322 = vmul.f32 %v1319, %v712
      %v1323 = vmul.f32 %v1320, %v711
      %1327 = vrot.lane.b32.xlu0 %v1321, 112
      %v1328 = vpop.permute.xlu0 %1327
      %1329 = vrot.lane.b32.xlu0 %v1322, 112
      %v1330 = vpop.permute.xlu0 %1329
      %1331 = vrot.lane.b32.xlu0 %v1323, 112
      %v1332 = vpop.permute.xlu0 %1331
      %v1333 = vsel %vm728, %v1328, %v1330
      %v1334 = vsel %vm728, %v1330, %v1332
      %1337 = vst [vmem:[#allocation3 + $0x30] sm:$0xff] %v1333
      %1338 = vst [vmem:[#allocation3 + $0x38] sm:$0xff] %v1334
      %v1339 = vld [vmem:[#allocation2] sm:$0xff]
      %v1340 = vld [vmem:[#allocation2 + $0x8] sm:$0xff]
      %v1341 = vld [vmem:[#allocation2 + $0x10] sm:$0xff]
      %1345 = vrot.lane.b32.xlu0 %v1339, 111
      %v1346 = vpop.permute.xlu0 %1345
      %1347 = vrot.lane.b32.xlu0 %v1340, 111
      %v1348 = vpop.permute.xlu0 %1347
      %1349 = vrot.lane.b32.xlu0 %v1341, 111
      %v1350 = vpop.permute.xlu0 %1349
      %v1351 = vsel %vm747, %v1346, %v1348
      %v1352 = vsel %vm747, %v1348, %v1350
      %1355 = vst [vmem:[#allocation3 + $0x40] sm:$0xff] %v1351
      %1356 = vst [vmem:[#allocation3 + $0x48] sm:$0xff] %v1352
      %v1357 = vld [vmem:[#allocation2] sm:$0xff]
      %v1358 = vld [vmem:[#allocation2 + $0x8] sm:$0xff]
      %v1359 = vld [vmem:[#allocation2 + $0x10] sm:$0xff]
      %v1360 = vmul.f32 %v1357, %v758
      %v1361 = vmul.f32 %v1358, %v762
      %v1362 = vmul.f32 %v1359, %v760
      %1366 = vrot.lane.b32.xlu0 %v1360, 110
      %v1367 = vpop.permute.xlu0 %1366
      %1368 = vrot.lane.b32.xlu0 %v1361, 110
      %v1369 = vpop.permute.xlu0 %1368
      %1370 = vrot.lane.b32.xlu0 %v1362, 110
      %v1371 = vpop.permute.xlu0 %1370
      %v1372 = vsel %vm778, %v1367, %v1369
      %v1373 = vsel %vm778, %v1369, %v1371
      %1376 = vst [vmem:[#allocation3 + $0x50] sm:$0xff] %v1372
      %1377 = vst [vmem:[#allocation3 + $0x58] sm:$0xff] %v1373
      %v1378 = vld [vmem:[#allocation2] sm:$0xff]
      %v1379 = vld [vmem:[#allocation2 + $0x8] sm:$0xff]
      %v1380 = vld [vmem:[#allocation2 + $0x10] sm:$0xff]
      %v1381 = vmul.f32 %v1378, %v789
      %v1382 = vmul.f32 %v1379, %v793
      %v1383 = vmul.f32 %v1380, %v791
      %1387 = vrot.lane.b32.xlu0 %v1381, 96
      %v1388 = vpop.permute.xlu0 %1387
      %1389 = vrot.lane.b32.xlu0 %v1382, 96
      %v1390 = vpop.permute.xlu0 %1389
      %1391 = vrot.lane.b32.xlu0 %v1383, 96
      %v1392 = vpop.permute.xlu0 %1391
      %v1393 = vsel %vm809, %v1388, %v1390
      %v1394 = vsel %vm809, %v1390, %v1392
      %1397 = vst [vmem:[#allocation3 + $0x60] sm:$0xff] %v1393
      %1398 = vst [vmem:[#allocation3 + $0x68] sm:$0xff] %v1394
      %v1399 = vld [vmem:[#allocation2] sm:$0xff]
      %v1400 = vld [vmem:[#allocation2 + $0x8] sm:$0xff]
      %v1401 = vld [vmem:[#allocation2 + $0x10] sm:$0xff]
      %1405 = vrot.lane.b32.xlu0 %v1399, 95
      %v1406 = vpop.permute.xlu0 %1405
      %1407 = vrot.lane.b32.xlu0 %v1400, 95
      %v1408 = vpop.permute.xlu0 %1407
      %1409 = vrot.lane.b32.xlu0 %v1401, 95
      %v1410 = vpop.permute.xlu0 %1409
      %v1411 = vsel %vm828, %v1406, %v1408
      %v1412 = vsel %vm828, %v1408, %v1410
      %1415 = vst [vmem:[#allocation3 + $0x70] sm:$0xff] %v1411
      %1416 = vst [vmem:[#allocation3 + $0x78] sm:$0xff] %v1412
      %v1417 = vld [vmem:[#allocation2] sm:$0xff]
      %v1418 = vld [vmem:[#allocation2 + $0x8] sm:$0xff]
      %v1419 = vld [vmem:[#allocation2 + $0x10] sm:$0xff]
      %v1420 = vmul.f32 %v1417, %v839
      %v1421 = vmul.f32 %v1418, %v842
      %v1422 = vmul.f32 %v1419, %v841
      %1426 = vrot.lane.b32.xlu0 %v1420, 94
      %v1427 = vpop.permute.xlu0 %1426
      %1428 = vrot.lane.b32.xlu0 %v1421, 94
      %v1429 = vpop.permute.xlu0 %1428
      %1430 = vrot.lane.b32.xlu0 %v1422, 94
      %v1431 = vpop.permute.xlu0 %1430
      %v1432 = vsel %vm858, %v1427, %v1429
      %v1433 = vsel %vm858, %v1429, %v1431
      %1436 = vst [vmem:[#allocation3 + $0x80] sm:$0xff] %v1432
      %1437 = vst [vmem:[#allocation3 + $0x88] sm:$0xff] %v1433
      %v1438 = vld [vmem:[%s7] sm:$0xff]
      %v1439 = vld [vmem:[#allocation3] sm:$0xff]
      %v1440 = vld [vmem:[#allocation3 + $0x8] sm:$0xff]
      %v1441 = vld [vmem:[#allocation3 + $0x10] sm:$0xff]
      %v1442 = vld [vmem:[#allocation3 + $0x18] sm:$0xff]
      %v1443 = vld [vmem:[#allocation3 + $0x20] sm:$0xff]
      %v1444 = vld [vmem:[#allocation3 + $0x28] sm:$0xff]
      %v1445 = vld [vmem:[#allocation3 + $0x30] sm:$0xff]
      %v1446 = vld [vmem:[#allocation3 + $0x38] sm:$0xff]
      %v1447 = vld [vmem:[#allocation3 + $0x40] sm:$0xff]
      %v1448 = vld [vmem:[#allocation3 + $0x48] sm:$0xff]
      %v1449 = vld [vmem:[#allocation3 + $0x50] sm:$0xff]
      %v1450 = vld [vmem:[#allocation3 + $0x58] sm:$0xff]
      %v1451 = vld [vmem:[#allocation3 + $0x60] sm:$0xff]
      %v1452 = vld [vmem:[#allocation3 + $0x68] sm:$0xff]
      %v1453 = vld [vmem:[#allocation3 + $0x70] sm:$0xff]
      %v1454 = vld [vmem:[#allocation3 + $0x78] sm:$0xff]
      %v1455 = vld [vmem:[#allocation3 + $0x80] sm:$0xff]
      %v1456 = vld [vmem:[#allocation3 + $0x88] sm:$0xff]
      %v1457 = vld [vmem:[%s8] sm:$0xff]
      %1459 = vset.pattern.permute.xlu0 0
      %1460 = vperm.xlu0 %1459, %v1457
      %v1461 = vpop.permute.xlu0 %1460
      %v1464 = vsel %vm890, %v1438, 0
      %1466 = vmatpush.msra.mxu0 0.0
      %1467 = vmatpush.msra.mxu0 0.0
      %1468 = vmatpush.msra.mxu0 0.0
      %1469 = vmatpush.msra.mxu0 0.0
      %1470 = vmatpush.msra.mxu0 0.0
      %1471 = vmatpush.msra.mxu0 0.0
      %1472 = vmatpush.msra.mxu0 0.0
      %1473 = vmatpush.msra.mxu0 %v1455
      %1474 = vmatpush.msra.mxu0 %v1453
      %1475 = vmatpush.msra.mxu0 %v1451
      %1476 = vmatpush.msra.mxu0 %v1449
      %1477 = vmatpush.msra.mxu0 %v1447
      %1478 = vmatpush.msra.mxu0 %v1445
      %1479 = vmatpush.msra.mxu0 %v1443
      %1480 = vmatpush.msra.mxu0 %v1441
      %1481 = vmatpush.msra.mxu0 %v1439
      %1482 = vmatmul.f32.gmra.mxu0 %v1464
      %v1483 = vpop.f32.mrf.mxu0
      %v1484 = vadd.f32 %v1461, %v1483
      %1485 = vdwg.mxu0
      %1486 = vmatpush.msra.mxu0 0.0
      %1487 = vmatpush.msra.mxu0 0.0
      %1488 = vmatpush.msra.mxu0 0.0
      %1489 = vmatpush.msra.mxu0 0.0
      %1490 = vmatpush.msra.mxu0 0.0
      %1491 = vmatpush.msra.mxu0 0.0
      %1492 = vmatpush.msra.mxu0 0.0
      %1493 = vmatpush.msra.mxu0 %v1456
      %1494 = vmatpush.msra.mxu0 %v1454
      %1495 = vmatpush.msra.mxu0 %v1452
      %1496 = vmatpush.msra.mxu0 %v1450
      %1497 = vmatpush.msra.mxu0 %v1448
      %1498 = vmatpush.msra.mxu0 %v1446
      %1499 = vmatpush.msra.mxu0 %v1444
      %1500 = vmatpush.msra.mxu0 %v1442
      %1501 = vmatpush.msra.mxu0 %v1440
      %1502 = vmatmul.f32.gmra.mxu0 %v1464
      %v1503 = vpop.f32.mrf.mxu0
      %v1504 = vadd.f32 %v1461, %v1503
      %1505 = vdwg.mxu0
      %v1506 = vsub.f32 0.0, %v1484
      %v1507 = vsub.f32 0.0, %v1504
      %v1508 = vmul.f32 %v1506, 1.442695
      %v1509 = vpow.pop %v1508
      %v1510 = vmul.f32 %v1507, 1.442695
      %v1511 = vpow.pop %v1510
      %v1512 = vadd.f32 %v1509, 1.0
      %v1513 = vadd.f32 %v1511, 1.0
      %v1514 = vrcp.pop %v1512
      %v1515 = vmul.f32 %v1512, %v1514
      %v1516 = vsub.f32 1.0, %v1515
      %v1517 = vmul.f32 %v1514, %v1516
      %v1518 = vadd.f32 %v1514, %v1517
      %vm1519 = vweird.f32 %v1512
      %vm1520 = vweird.f32 %v1514
      %vm1521 = vmor %vm1519, %vm1520
      %v1522 = vsel %vm1521, %v1514, %v1518
      %v1523 = vand.u32 2147483647, %v1512
      %vm1524 = vcmp.eq.f32.partialorder %v1523, 8.507059e+37
      %v1525 = vand.u32 %v1512, 2147483648
      %v1526 = vor.u32 1.1754944e-38, %v1525
      %v1527 = vsel %vm1524, %v1526, %v1522
      %v1528 = vmul.f32 1.0, %v1527
      %v1529 = vrcp.pop %v1513
      %v1530 = vmul.f32 %v1513, %v1529
      %v1531 = vsub.f32 1.0, %v1530
      %v1532 = vmul.f32 %v1529, %v1531
      %v1533 = vadd.f32 %v1529, %v1532
      %vm1534 = vweird.f32 %v1513
      %vm1535 = vweird.f32 %v1529
      %vm1536 = vmor %vm1534, %vm1535
      %v1537 = vsel %vm1536, %v1529, %v1533
      %v1538 = vand.u32 2147483647, %v1513
      %vm1539 = vcmp.eq.f32.partialorder %v1538, 8.507059e+37
      %v1540 = vand.u32 %v1513, 2147483648
      %v1541 = vor.u32 1.1754944e-38, %v1540
      %v1542 = vsel %vm1539, %v1541, %v1537
      %v1543 = vmul.f32 1.0, %v1542
      %v1544 = vmul.f32 %v1484, %v1528
      %v1545 = vmul.f32 %v1504, %v1543
      %1548 = vrot.lane.b32.xlu0 %v1544, 17
      %v1549 = vpop.permute.xlu0 %1548
      %1550 = vrot.lane.b32.xlu0 %v1545, 17
      %v1551 = vpop.permute.xlu0 %1550
      %v1552 = vsel %vm632, %v1549, %v1551
      %1556 = vst.msk [vmem:[#allocation2] sm:$0xff] %vm637, %v1549
      %1557 = vst [vmem:[#allocation2 + $0x8] sm:$0xff] %v1552
      %1558 = vst.msk [vmem:[#allocation2 + $0x10] sm:$0xff] %vm632, %v1551
      %v1559 = vld [vmem:[#allocation2] sm:$0xff]
      %v1560 = vld [vmem:[#allocation2 + $0x8] sm:$0xff]
      %v1561 = vmul.f32 %v1559, %v644
      %v1562 = vmul.f32 %v1560, %v645
      %1563 = vst [vmem:[#allocation3] sm:$0xff] %v1561
      %1564 = vst [vmem:[#allocation3 + $0x8] sm:$0xff] %v1562
      %v1565 = vld [vmem:[#allocation2] sm:$0xff]
      %v1566 = vld [vmem:[#allocation2 + $0x8] sm:$0xff]
      %v1567 = vld [vmem:[#allocation2 + $0x10] sm:$0xff]
      %1571 = vrot.lane.b32.xlu0 %v1565, 127
      %v1572 = vpop.permute.xlu0 %1571
      %1573 = vrot.lane.b32.xlu0 %v1566, 127
      %v1574 = vpop.permute.xlu0 %1573
      %1575 = vrot.lane.b32.xlu0 %v1567, 127
      %v1576 = vpop.permute.xlu0 %1575
      %v1577 = vsel %vm664, %v1572, %v1574
      %v1578 = vsel %vm664, %v1574, %v1576
      %1581 = vst [vmem:[#allocation3 + $0x10] sm:$0xff] %v1577
      %1582 = vst [vmem:[#allocation3 + $0x18] sm:$0xff] %v1578
      %v1583 = vld [vmem:[#allocation2] sm:$0xff]
      %v1584 = vld [vmem:[#allocation2 + $0x8] sm:$0xff]
      %v1585 = vld [vmem:[#allocation2 + $0x10] sm:$0xff]
      %v1586 = vmul.f32 %v1583, %v678
      %v1587 = vmul.f32 %v1584, %v682
      %v1588 = vmul.f32 %v1585, %v680
      %1592 = vrot.lane.b32.xlu0 %v1586, 126
      %v1593 = vpop.permute.xlu0 %1592
      %1594 = vrot.lane.b32.xlu0 %v1587, 126
      %v1595 = vpop.permute.xlu0 %1594
      %1596 = vrot.lane.b32.xlu0 %v1588, 126
      %v1597 = vpop.permute.xlu0 %1596
      %v1598 = vsel %vm698, %v1593, %v1595
      %v1599 = vsel %vm698, %v1595, %v1597
      %1602 = vst [vmem:[#allocation3 + $0x20] sm:$0xff] %v1598
      %1603 = vst [vmem:[#allocation3 + $0x28] sm:$0xff] %v1599
      %v1604 = vld [vmem:[#allocation2] sm:$0xff]
      %v1605 = vld [vmem:[#allocation2 + $0x8] sm:$0xff]
      %v1606 = vld [vmem:[#allocation2 + $0x10] sm:$0xff]
      %v1607 = vmul.f32 %v1604, %v709
      %v1608 = vmul.f32 %v1605, %v712
      %v1609 = vmul.f32 %v1606, %v711
      %1613 = vrot.lane.b32.xlu0 %v1607, 112
      %v1614 = vpop.permute.xlu0 %1613
      %1615 = vrot.lane.b32.xlu0 %v1608, 112
      %v1616 = vpop.permute.xlu0 %1615
      %1617 = vrot.lane.b32.xlu0 %v1609, 112
      %v1618 = vpop.permute.xlu0 %1617
      %v1619 = vsel %vm728, %v1614, %v1616
      %v1620 = vsel %vm728, %v1616, %v1618
      %1623 = vst [vmem:[#allocation3 + $0x30] sm:$0xff] %v1619
      %1624 = vst [vmem:[#allocation3 + $0x38] sm:$0xff] %v1620
      %v1625 = vld [vmem:[#allocation2] sm:$0xff]
      %v1626 = vld [vmem:[#allocation2 + $0x8] sm:$0xff]
      %v1627 = vld [vmem:[#allocation2 + $0x10] sm:$0xff]
      %1631 = vrot.lane.b32.xlu0 %v1625, 111
      %v1632 = vpop.permute.xlu0 %1631
      %1633 = vrot.lane.b32.xlu0 %v1626, 111
      %v1634 = vpop.permute.xlu0 %1633
      %1635 = vrot.lane.b32.xlu0 %v1627, 111
      %v1636 = vpop.permute.xlu0 %1635
      %v1637 = vsel %vm747, %v1632, %v1634
      %v1638 = vsel %vm747, %v1634, %v1636
      %1641 = vst [vmem:[#allocation3 + $0x40] sm:$0xff] %v1637
      %1642 = vst [vmem:[#allocation3 + $0x48] sm:$0xff] %v1638
      %v1643 = vld [vmem:[#allocation2] sm:$0xff]
      %v1644 = vld [vmem:[#allocation2 + $0x8] sm:$0xff]
      %v1645 = vld [vmem:[#allocation2 + $0x10] sm:$0xff]
      %v1646 = vmul.f32 %v1643, %v758
      %v1647 = vmul.f32 %v1644, %v762
      %v1648 = vmul.f32 %v1645, %v760
      %1652 = vrot.lane.b32.xlu0 %v1646, 110
      %v1653 = vpop.permute.xlu0 %1652
      %1654 = vrot.lane.b32.xlu0 %v1647, 110
      %v1655 = vpop.permute.xlu0 %1654
      %1656 = vrot.lane.b32.xlu0 %v1648, 110
      %v1657 = vpop.permute.xlu0 %1656
      %v1658 = vsel %vm778, %v1653, %v1655
      %v1659 = vsel %vm778, %v1655, %v1657
      %1662 = vst [vmem:[#allocation3 + $0x50] sm:$0xff] %v1658
      %1663 = vst [vmem:[#allocation3 + $0x58] sm:$0xff] %v1659
      %v1664 = vld [vmem:[#allocation2] sm:$0xff]
      %v1665 = vld [vmem:[#allocation2 + $0x8] sm:$0xff]
      %v1666 = vld [vmem:[#allocation2 + $0x10] sm:$0xff]
      %v1667 = vmul.f32 %v1664, %v789
      %v1668 = vmul.f32 %v1665, %v793
      %v1669 = vmul.f32 %v1666, %v791
      %1673 = vrot.lane.b32.xlu0 %v1667, 96
      %v1674 = vpop.permute.xlu0 %1673
      %1675 = vrot.lane.b32.xlu0 %v1668, 96
      %v1676 = vpop.permute.xlu0 %1675
      %1677 = vrot.lane.b32.xlu0 %v1669, 96
      %v1678 = vpop.permute.xlu0 %1677
      %v1679 = vsel %vm809, %v1674, %v1676
      %v1680 = vsel %vm809, %v1676, %v1678
      %1683 = vst [vmem:[#allocation3 + $0x60] sm:$0xff] %v1679
      %1684 = vst [vmem:[#allocation3 + $0x68] sm:$0xff] %v1680
      %v1685 = vld [vmem:[#allocation2] sm:$0xff]
      %v1686 = vld [vmem:[#allocation2 + $0x8] sm:$0xff]
      %v1687 = vld [vmem:[#allocation2 + $0x10] sm:$0xff]
      %1691 = vrot.lane.b32.xlu0 %v1685, 95
      %v1692 = vpop.permute.xlu0 %1691
      %1693 = vrot.lane.b32.xlu0 %v1686, 95
      %v1694 = vpop.permute.xlu0 %1693
      %1695 = vrot.lane.b32.xlu0 %v1687, 95
      %v1696 = vpop.permute.xlu0 %1695
      %v1697 = vsel %vm828, %v1692, %v1694
      %v1698 = vsel %vm828, %v1694, %v1696
      %1701 = vst [vmem:[#allocation3 + $0x70] sm:$0xff] %v1697
      %1702 = vst [vmem:[#allocation3 + $0x78] sm:$0xff] %v1698
      %v1703 = vld [vmem:[#allocation2] sm:$0xff]
      %v1704 = vld [vmem:[#allocation2 + $0x8] sm:$0xff]
      %v1705 = vld [vmem:[#allocation2 + $0x10] sm:$0xff]
      %v1706 = vmul.f32 %v1703, %v839
      %v1707 = vmul.f32 %v1704, %v842
      %v1708 = vmul.f32 %v1705, %v841
      %1712 = vrot.lane.b32.xlu0 %v1706, 94
      %v1713 = vpop.permute.xlu0 %1712
      %1714 = vrot.lane.b32.xlu0 %v1707, 94
      %v1715 = vpop.permute.xlu0 %1714
      %1716 = vrot.lane.b32.xlu0 %v1708, 94
      %v1717 = vpop.permute.xlu0 %1716
      %v1718 = vsel %vm858, %v1713, %v1715
      %v1719 = vsel %vm858, %v1715, %v1717
      %1722 = vst [vmem:[#allocation3 + $0x80] sm:$0xff] %v1718
      %1723 = vst [vmem:[#allocation3 + $0x88] sm:$0xff] %v1719
      %v1724 = vld [vmem:[%s9] sm:$0xff]
      %v1725 = vld [vmem:[#allocation3] sm:$0xff]
      %v1726 = vld [vmem:[#allocation3 + $0x8] sm:$0xff]
      %v1727 = vld [vmem:[#allocation3 + $0x10] sm:$0xff]
      %v1728 = vld [vmem:[#allocation3 + $0x18] sm:$0xff]
      %v1729 = vld [vmem:[#allocation3 + $0x20] sm:$0xff]
      %v1730 = vld [vmem:[#allocation3 + $0x28] sm:$0xff]
      %v1731 = vld [vmem:[#allocation3 + $0x30] sm:$0xff]
      %v1732 = vld [vmem:[#allocation3 + $0x38] sm:$0xff]
      %v1733 = vld [vmem:[#allocation3 + $0x40] sm:$0xff]
      %v1734 = vld [vmem:[#allocation3 + $0x48] sm:$0xff]
      %v1735 = vld [vmem:[#allocation3 + $0x50] sm:$0xff]
      %v1736 = vld [vmem:[#allocation3 + $0x58] sm:$0xff]
      %v1737 = vld [vmem:[#allocation3 + $0x60] sm:$0xff]
      %v1738 = vld [vmem:[#allocation3 + $0x68] sm:$0xff]
      %v1739 = vld [vmem:[#allocation3 + $0x70] sm:$0xff]
      %v1740 = vld [vmem:[#allocation3 + $0x78] sm:$0xff]
      %v1741 = vld [vmem:[#allocation3 + $0x80] sm:$0xff]
      %v1742 = vld [vmem:[#allocation3 + $0x88] sm:$0xff]
      %v1743 = vld [vmem:[%s10] sm:$0xff]
      %1745 = vset.pattern.permute.xlu0 0
      %1746 = vperm.xlu0 %1745, %v1743
      %v1747 = vpop.permute.xlu0 %1746
      %v1750 = vsel %vm890, %v1724, 0
      %1752 = vmatpush.msra.mxu0 0.0
      %1753 = vmatpush.msra.mxu0 0.0
      %1754 = vmatpush.msra.mxu0 0.0
      %1755 = vmatpush.msra.mxu0 0.0
      %1756 = vmatpush.msra.mxu0 0.0
      %1757 = vmatpush.msra.mxu0 0.0
      %1758 = vmatpush.msra.mxu0 0.0
      %1759 = vmatpush.msra.mxu0 %v1741
      %1760 = vmatpush.msra.mxu0 %v1739
      %1761 = vmatpush.msra.mxu0 %v1737
      %1762 = vmatpush.msra.mxu0 %v1735
      %1763 = vmatpush.msra.mxu0 %v1733
      %1764 = vmatpush.msra.mxu0 %v1731
      %1765 = vmatpush.msra.mxu0 %v1729
      %1766 = vmatpush.msra.mxu0 %v1727
      %1767 = vmatpush.msra.mxu0 %v1725
      %1768 = vmatmul.f32.gmra.mxu0 %v1750
      %v1769 = vpop.f32.mrf.mxu0
      %v1770 = vadd.f32 %v1747, %v1769
      %1771 = vdwg.mxu0
      %1772 = vmatpush.msra.mxu0 0.0
      %1773 = vmatpush.msra.mxu0 0.0
      %1774 = vmatpush.msra.mxu0 0.0
      %1775 = vmatpush.msra.mxu0 0.0
      %1776 = vmatpush.msra.mxu0 0.0
      %1777 = vmatpush.msra.mxu0 0.0
      %1778 = vmatpush.msra.mxu0 0.0
      %1779 = vmatpush.msra.mxu0 %v1742
      %1780 = vmatpush.msra.mxu0 %v1740
      %1781 = vmatpush.msra.mxu0 %v1738
      %1782 = vmatpush.msra.mxu0 %v1736
      %1783 = vmatpush.msra.mxu0 %v1734
      %1784 = vmatpush.msra.mxu0 %v1732
      %1785 = vmatpush.msra.mxu0 %v1730
      %1786 = vmatpush.msra.mxu0 %v1728
      %1787 = vmatpush.msra.mxu0 %v1726
      %1788 = vmatmul.f32.gmra.mxu0 %v1750
      %v1789 = vpop.f32.mrf.mxu0
      %v1790 = vadd.f32 %v1747, %v1789
      %1791 = vdwg.mxu0
      %v1792 = vsub.f32 0.0, %v1770
      %v1793 = vsub.f32 0.0, %v1790
      %v1794 = vmul.f32 %v1792, 1.442695
      %v1795 = vpow.pop %v1794
      %v1796 = vmul.f32 %v1793, 1.442695
      %v1797 = vpow.pop %v1796
      %v1798 = vadd.f32 %v1795, 1.0
      %v1799 = vadd.f32 %v1797, 1.0
      %v1800 = vrcp.pop %v1798
      %v1801 = vmul.f32 %v1798, %v1800
      %v1802 = vsub.f32 1.0, %v1801
      %v1803 = vmul.f32 %v1800, %v1802
      %v1804 = vadd.f32 %v1800, %v1803
      %vm1805 = vweird.f32 %v1798
      %vm1806 = vweird.f32 %v1800
      %vm1807 = vmor %vm1805, %vm1806
      %v1808 = vsel %vm1807, %v1800, %v1804
      %v1809 = vand.u32 2147483647, %v1798
      %vm1810 = vcmp.eq.f32.partialorder %v1809, 8.507059e+37
      %v1811 = vand.u32 %v1798, 2147483648
      %v1812 = vor.u32 1.1754944e-38, %v1811
      %v1813 = vsel %vm1810, %v1812, %v1808
      %v1814 = vmul.f32 1.0, %v1813
      %v1815 = vrcp.pop %v1799
      %v1816 = vmul.f32 %v1799, %v1815
      %v1817 = vsub.f32 1.0, %v1816
      %v1818 = vmul.f32 %v1815, %v1817
      %v1819 = vadd.f32 %v1815, %v1818
      %vm1820 = vweird.f32 %v1799
      %vm1821 = vweird.f32 %v1815
      %vm1822 = vmor %vm1820, %vm1821
      %v1823 = vsel %vm1822, %v1815, %v1819
      %v1824 = vand.u32 2147483647, %v1799
      %vm1825 = vcmp.eq.f32.partialorder %v1824, 8.507059e+37
      %v1826 = vand.u32 %v1799, 2147483648
      %v1827 = vor.u32 1.1754944e-38, %v1826
      %v1828 = vsel %vm1825, %v1827, %v1823
      %v1829 = vmul.f32 1.0, %v1828
      %v1830 = vmul.f32 %v1770, %v1814
      %v1831 = vmul.f32 %v1790, %v1829
      %1832 = vst [vmem:[#allocation3] sm:$0xff] %v1830
      %1833 = vst [vmem:[#allocation3 + $0x8] sm:$0xff] %v1831
      %1834 = vst [vmem:[#allocation3 + $0x10] sm:$0xff] %v1258
      %1835 = vst [vmem:[#allocation3 + $0x18] sm:$0xff] %v1259
      %1836 = vst [vmem:[#allocation3 + $0x20] sm:$0xff] %v624
      %1837 = vst [vmem:[#allocation3 + $0x28] sm:$0xff] %v625
      %1838 = vst [vmem:[#allocation3 + $0x30] sm:$0xff] %v622
      %1839 = vst [vmem:[#allocation3 + $0x38] sm:$0xff] %v623
      %v1840 = vld [vmem:[%s11] sm:$0xff]
      %v1841 = vld [vmem:[%s11 + $0x8] sm:$0xff]
      %v1842 = vld [vmem:[%s11 + $0x10] sm:$0xff]
      %v1843 = vld [vmem:[%s11 + $0x18] sm:$0xff]
      %v1844 = vld [vmem:[#allocation3] sm:$0xff]
      %v1845 = vld [vmem:[#allocation3 + $0x8] sm:$0xff]
      %v1846 = vld [vmem:[#allocation3 + $0x10] sm:$0xff]
      %v1847 = vld [vmem:[#allocation3 + $0x18] sm:$0xff]
      %v1848 = vld [vmem:[#allocation3 + $0x20] sm:$0xff]
      %v1849 = vld [vmem:[#allocation3 + $0x28] sm:$0xff]
      %v1850 = vld [vmem:[#allocation3 + $0x30] sm:$0xff]
      %v1851 = vld [vmem:[#allocation3 + $0x38] sm:$0xff]
      %v1852 = vld [vmem:[%s12] sm:$0xff]
      %v1853 = vld [vmem:[%s12 + $0x8] sm:$0xff]
      %v1854 = vld [vmem:[%s12 + $0x10] sm:$0xff]
      %v1855 = vld [vmem:[%s12 + $0x18] sm:$0xff]
      %1857 = vset.pattern.permute.xlu0 0
      %1858 = vperm.xlu0 %1857, %v1852
      %v1859 = vpop.permute.xlu0 %1858
      %1862 = vset.pattern.permute.xlu0 0
      %1863 = vperm.xlu0 %1862, %v1853
      %v1864 = vpop.permute.xlu0 %1863
      %1867 = vset.pattern.permute.xlu0 0
      %1868 = vperm.xlu0 %1867, %v1854
      %v1869 = vpop.permute.xlu0 %1868
      %1872 = vset.pattern.permute.xlu0 0
      %1873 = vperm.xlu0 %1872, %v1855
      %v1874 = vpop.permute.xlu0 %1873
      %v1877 = vsel %vm792, %v1840, 0
      %v1880 = vsel %vm792, %v1841, 0
      %v1883 = vsel %vm792, %v1842, 0
      %v1886 = vsel %vm792, %v1843, 0
      %1888 = vmatpush.msra.mxu0 0.0
      %1889 = vmatpush.msra.mxu0 0.0
      %1890 = vmatpush.msra.mxu0 0.0
      %1891 = vmatpush.msra.mxu0 0.0
      %1892 = vmatpush.msra.mxu0 0.0
      %1893 = vmatpush.msra.mxu0 0.0
      %1894 = vmatpush.msra.mxu0 0.0
      %1895 = vmatpush.msra.mxu0 0.0
      %1896 = vmatpush.msra.mxu0 0.0
      %1897 = vmatpush.msra.mxu0 0.0
      %1898 = vmatpush.msra.mxu0 0.0
      %1899 = vmatpush.msra.mxu0 0.0
      %1900 = vmatpush.msra.mxu0 %v1850
      %1901 = vmatpush.msra.mxu0 %v1848
      %1902 = vmatpush.msra.mxu0 %v1846
      %1903 = vmatpush.msra.mxu0 %v1844
      %1904 = vmatmul.f32.gmra.mxu0 %v1877
      %v1905 = vpop.f32.mrf.mxu0
      %v1906 = vadd.f32 %v1859, %v1905
      %1907 = vmatmul.f32.gmra.mxu0 %v1880
      %v1908 = vpop.f32.mrf.mxu0
      %v1909 = vadd.f32 %v1864, %v1908
      %1910 = vmatmul.f32.gmra.mxu0 %v1883
      %v1911 = vpop.f32.mrf.mxu0
      %v1912 = vadd.f32 %v1869, %v1911
      %1913 = vmatmul.f32.gmra.mxu0 %v1886
      %v1914 = vpop.f32.mrf.mxu0
      %v1915 = vadd.f32 %v1874, %v1914
      %1916 = vdwg.mxu0
      %1917 = vmatpush.msra.mxu0 0.0
      %1918 = vmatpush.msra.mxu0 0.0
      %1919 = vmatpush.msra.mxu0 0.0
      %1920 = vmatpush.msra.mxu0 0.0
      %1921 = vmatpush.msra.mxu0 0.0
      %1922 = vmatpush.msra.mxu0 0.0
      %1923 = vmatpush.msra.mxu0 0.0
      %1924 = vmatpush.msra.mxu0 0.0
      %1925 = vmatpush.msra.mxu0 0.0
      %1926 = vmatpush.msra.mxu0 0.0
      %1927 = vmatpush.msra.mxu0 0.0
      %1928 = vmatpush.msra.mxu0 0.0
      %1929 = vmatpush.msra.mxu0 %v1851
      %1930 = vmatpush.msra.mxu0 %v1849
      %1931 = vmatpush.msra.mxu0 %v1847
      %1932 = vmatpush.msra.mxu0 %v1845
      %1933 = vmatmul.f32.gmra.mxu0 %v1877
      %v1934 = vpop.f32.mrf.mxu0
      %v1935 = vadd.f32 %v1859, %v1934
      %1936 = vmatmul.f32.gmra.mxu0 %v1880
      %v1937 = vpop.f32.mrf.mxu0
      %v1938 = vadd.f32 %v1864, %v1937
      %1939 = vmatmul.f32.gmra.mxu0 %v1883
      %v1940 = vpop.f32.mrf.mxu0
      %v1941 = vadd.f32 %v1869, %v1940
      %1942 = vmatmul.f32.gmra.mxu0 %v1886
      %v1943 = vpop.f32.mrf.mxu0
      %v1944 = vadd.f32 %v1874, %v1943
      %1945 = vdwg.mxu0
      %v1946 = vsub.f32 0.0, %v1906
      %v1947 = vsub.f32 0.0, %v1935
      %v1948 = vsub.f32 0.0, %v1909
      %v1949 = vsub.f32 0.0, %v1938
      %v1950 = vsub.f32 0.0, %v1912
      %v1951 = vsub.f32 0.0, %v1941
      %v1952 = vsub.f32 0.0, %v1915
      %v1953 = vsub.f32 0.0, %v1944
      %v1954 = vmul.f32 %v1946, 1.442695
      %v1955 = vpow.pop %v1954
      %v1956 = vmul.f32 %v1947, 1.442695
      %v1957 = vpow.pop %v1956
      %v1958 = vmul.f32 %v1948, 1.442695
      %v1959 = vpow.pop %v1958
      %v1960 = vmul.f32 %v1949, 1.442695
      %v1961 = vpow.pop %v1960
      %v1962 = vmul.f32 %v1950, 1.442695
      %v1963 = vpow.pop %v1962
      %v1964 = vmul.f32 %v1951, 1.442695
      %v1965 = vpow.pop %v1964
      %v1966 = vmul.f32 %v1952, 1.442695
      %v1967 = vpow.pop %v1966
      %v1968 = vmul.f32 %v1953, 1.442695
      %v1969 = vpow.pop %v1968
      %v1970 = vadd.f32 %v1955, 1.0
      %v1971 = vadd.f32 %v1957, 1.0
      %v1972 = vadd.f32 %v1959, 1.0
      %v1973 = vadd.f32 %v1961, 1.0
      %v1974 = vadd.f32 %v1963, 1.0
      %v1975 = vadd.f32 %v1965, 1.0
      %v1976 = vadd.f32 %v1967, 1.0
      %v1977 = vadd.f32 %v1969, 1.0
      %v1978 = vrcp.pop %v1970
      %v1979 = vmul.f32 %v1970, %v1978
      %v1980 = vsub.f32 1.0, %v1979
      %v1981 = vmul.f32 %v1978, %v1980
      %v1982 = vadd.f32 %v1978, %v1981
      %vm1983 = vweird.f32 %v1970
      %vm1984 = vweird.f32 %v1978
      %vm1985 = vmor %vm1983, %vm1984
      %v1986 = vsel %vm1985, %v1978, %v1982
      %v1987 = vand.u32 2147483647, %v1970
      %vm1988 = vcmp.eq.f32.partialorder %v1987, 8.507059e+37
      %v1989 = vand.u32 %v1970, 2147483648
      %v1990 = vor.u32 1.1754944e-38, %v1989
      %v1991 = vsel %vm1988, %v1990, %v1986
      %v1992 = vmul.f32 1.0, %v1991
      %v1993 = vrcp.pop %v1971
      %v1994 = vmul.f32 %v1971, %v1993
      %v1995 = vsub.f32 1.0, %v1994
      %v1996 = vmul.f32 %v1993, %v1995
      %v1997 = vadd.f32 %v1993, %v1996
      %vm1998 = vweird.f32 %v1971
      %vm1999 = vweird.f32 %v1993
      %vm2000 = vmor %vm1998, %vm1999
      %v2001 = vsel %vm2000, %v1993, %v1997
      %v2002 = vand.u32 2147483647, %v1971
      %vm2003 = vcmp.eq.f32.partialorder %v2002, 8.507059e+37
      %v2004 = vand.u32 %v1971, 2147483648
      %v2005 = vor.u32 1.1754944e-38, %v2004
      %v2006 = vsel %vm2003, %v2005, %v2001
      %v2007 = vmul.f32 1.0, %v2006
      %v2008 = vrcp.pop %v1972
      %v2009 = vmul.f32 %v1972, %v2008
      %v2010 = vsub.f32 1.0, %v2009
      %v2011 = vmul.f32 %v2008, %v2010
      %v2012 = vadd.f32 %v2008, %v2011
      %vm2013 = vweird.f32 %v1972
      %vm2014 = vweird.f32 %v2008
      %vm2015 = vmor %vm2013, %vm2014
      %v2016 = vsel %vm2015, %v2008, %v2012
      %v2017 = vand.u32 2147483647, %v1972
      %vm2018 = vcmp.eq.f32.partialorder %v2017, 8.507059e+37
      %v2019 = vand.u32 %v1972, 2147483648
      %v2020 = vor.u32 1.1754944e-38, %v2019
      %v2021 = vsel %vm2018, %v2020, %v2016
      %v2022 = vmul.f32 1.0, %v2021
      %v2023 = vrcp.pop %v1973
      %v2024 = vmul.f32 %v1973, %v2023
      %v2025 = vsub.f32 1.0, %v2024
      %v2026 = vmul.f32 %v2023, %v2025
      %v2027 = vadd.f32 %v2023, %v2026
      %vm2028 = vweird.f32 %v1973
      %vm2029 = vweird.f32 %v2023
      %vm2030 = vmor %vm2028, %vm2029
      %v2031 = vsel %vm2030, %v2023, %v2027
      %v2032 = vand.u32 2147483647, %v1973
      %vm2033 = vcmp.eq.f32.partialorder %v2032, 8.507059e+37
      %v2034 = vand.u32 %v1973, 2147483648
      %v2035 = vor.u32 1.1754944e-38, %v2034
      %v2036 = vsel %vm2033, %v2035, %v2031
      %v2037 = vmul.f32 1.0, %v2036
      %v2038 = vrcp.pop %v1974
      %v2039 = vmul.f32 %v1974, %v2038
      %v2040 = vsub.f32 1.0, %v2039
      %v2041 = vmul.f32 %v2038, %v2040
      %v2042 = vadd.f32 %v2038, %v2041
      %vm2043 = vweird.f32 %v1974
      %vm2044 = vweird.f32 %v2038
      %vm2045 = vmor %vm2043, %vm2044
      %v2046 = vsel %vm2045, %v2038, %v2042
      %v2047 = vand.u32 2147483647, %v1974
      %vm2048 = vcmp.eq.f32.partialorder %v2047, 8.507059e+37
      %v2049 = vand.u32 %v1974, 2147483648
      %v2050 = vor.u32 1.1754944e-38, %v2049
      %v2051 = vsel %vm2048, %v2050, %v2046
      %v2052 = vmul.f32 1.0, %v2051
      %v2053 = vrcp.pop %v1975
      %v2054 = vmul.f32 %v1975, %v2053
      %v2055 = vsub.f32 1.0, %v2054
      %v2056 = vmul.f32 %v2053, %v2055
      %v2057 = vadd.f32 %v2053, %v2056
      %vm2058 = vweird.f32 %v1975
      %vm2059 = vweird.f32 %v2053
      %vm2060 = vmor %vm2058, %vm2059
      %v2061 = vsel %vm2060, %v2053, %v2057
      %v2062 = vand.u32 2147483647, %v1975
      %vm2063 = vcmp.eq.f32.partialorder %v2062, 8.507059e+37
      %v2064 = vand.u32 %v1975, 2147483648
      %v2065 = vor.u32 1.1754944e-38, %v2064
      %v2066 = vsel %vm2063, %v2065, %v2061
      %v2067 = vmul.f32 1.0, %v2066
      %v2068 = vrcp.pop %v1976
      %v2069 = vmul.f32 %v1976, %v2068
      %v2070 = vsub.f32 1.0, %v2069
      %v2071 = vmul.f32 %v2068, %v2070
      %v2072 = vadd.f32 %v2068, %v2071
      %vm2073 = vweird.f32 %v1976
      %vm2074 = vweird.f32 %v2068
      %vm2075 = vmor %vm2073, %vm2074
      %v2076 = vsel %vm2075, %v2068, %v2072
      %v2077 = vand.u32 2147483647, %v1976
      %vm2078 = vcmp.eq.f32.partialorder %v2077, 8.507059e+37
      %v2079 = vand.u32 %v1976, 2147483648
      %v2080 = vor.u32 1.1754944e-38, %v2079
      %v2081 = vsel %vm2078, %v2080, %v2076
      %v2082 = vmul.f32 1.0, %v2081
      %v2083 = vrcp.pop %v1977
      %v2084 = vmul.f32 %v1977, %v2083
      %v2085 = vsub.f32 1.0, %v2084
      %v2086 = vmul.f32 %v2083, %v2085
      %v2087 = vadd.f32 %v2083, %v2086
      %vm2088 = vweird.f32 %v1977
      %vm2089 = vweird.f32 %v2083
      %vm2090 = vmor %vm2088, %vm2089
      %v2091 = vsel %vm2090, %v2083, %v2087
      %v2092 = vand.u32 2147483647, %v1977
      %vm2093 = vcmp.eq.f32.partialorder %v2092, 8.507059e+37
      %v2094 = vand.u32 %v1977, 2147483648
      %v2095 = vor.u32 1.1754944e-38, %v2094
      %v2096 = vsel %vm2093, %v2095, %v2091
      %v2097 = vmul.f32 1.0, %v2096
      %v2098 = vmul.f32 %v1906, %v1992
      %v2099 = vmul.f32 %v1935, %v2007
      %v2100 = vmul.f32 %v1909, %v2022
      %v2101 = vmul.f32 %v1938, %v2037
      %v2102 = vmul.f32 %v1912, %v2052
      %v2103 = vmul.f32 %v1941, %v2067
      %v2104 = vmul.f32 %v1915, %v2082
      %v2105 = vmul.f32 %v1944, %v2097
      %2106 = vst [vmem:[%s467] sm:$0xff] %v2098
      %2107 = vst [vmem:[%s467 + $0x8] sm:$0xff] %v2099
      %2108 = vst [vmem:[%s467 + $0x10] sm:$0xff] %v2100
      %2109 = vst [vmem:[%s467 + $0x18] sm:$0xff] %v2101
      %2110 = vst [vmem:[%s467 + $0x20] sm:$0xff] %v2102
      %2111 = vst [vmem:[%s467 + $0x28] sm:$0xff] %v2103
      %2112 = vst [vmem:[%s467 + $0x30] sm:$0xff] %v2104
      %2113 = vst [vmem:[%s467 + $0x38] sm:$0xff] %v2105
      %p2114 = scmp.lt.s32.totalorder %s25, 1
      %s2115 = scalar_select %p2114, %s25, 1
      %s2116 = smul.addr %s2115, 8
      %s2117 = smul.addr %s2116, 8
      %s2118 = scalar_lea.vmem %s14, %s2117
      // Predicated region
      $region77: #{_elan_apply.1} parent=75 // pred_check
        %p2119 = pneg %p342
      $region78: #{_elan_apply.1} parent=75 // pred_check_branch
        %2121 = sbr.rel (%p2119) target = $region80
      $region79: #{_elan_apply.1} parent=75 // pred_region
        _
      $region80: #{_elan_apply.1} parent=75 // pred_fallthru
        _
    $region76: #{_elan_apply.1} parent=5 // pred_fallthru
      _
    %p2122 = scmp.le.s32.totalorder 2, %s20
    // Predicated region
    $region81: #{_elan_apply.1} parent=5 // pred_check
      %p2123 = pneg %p2122
    $region82: #{_elan_apply.1} parent=5 // pred_check_branch
      %2125 = sbr.rel (%p2123) target = $region84
    $region83: #{_elan_apply.1} parent=5 // pred_region
      %s2126 = ssub.s32 %s20, 2
      // Predicated region
      $region85: #{_elan_apply.1} parent=83 // pred_check
        %p2127 = pneg %p348
      $region86: #{_elan_apply.1} parent=83 // pred_check_branch
        %2129 = sbr.rel (%p2127) target = $region88
      $region87: #{_elan_apply.1} parent=83 // pred_region
        %p2130 = scmp.lt.s32.totalorder %s26, 1
        %s2131 = scalar_select %p2130, %s26, 1
        %s2132 = smul.addr %s2131, 8
        %s2133 = smul.addr %s2132, 8
        %s2134 = scalar_lea.vmem %s14, %s2133
      $region88: #{_elan_apply.1} parent=83 // pred_fallthru
        _
    $region84: #{_elan_apply.1} parent=5 // pred_fallthru
      _
  $region6: #{_elan_apply.1} parent=0 // loop_footer
    %s24 = sadd.s32 1, %s20
  $region7: #{_elan_apply.1} parent=0 // loop_footer_branch
    %19 = sbr.rel target = $region3
  $region8: #{_elan_apply.1} parent=0 // loop_exit
    _

</llo_original>
